<compile_context>
chip_gen: v6e
topology: v6e:2x2x1
jax: 0.10.0
libtpu: 0.0.40
codegen_flags: <defaults>
</compile_context>

<pallas_src>
import functools

import jax
import jax.numpy as jnp
from jax.experimental import pallas as pl
from jax.experimental.pallas import tpu as pltpu


# ============================================================================
# Kernel 1: fused "avg" aggregation (torch.sparse.softmax + sparse.mm) for the
#           ent and rel adjacencies, writing one (N, H_ent+H_rel) feature map.
# ============================================================================
def _gcn_avg_kernel(adj_e_ref, adj_r_ref, inv_e_ref, inv_r_ref,
                    emb_e_ref, emb_r_ref, out_ref, acc_e_ref, acc_r_ref):
    k = pl.program_id(1)

    @pl.when(k == 0)
    def _():
        acc_e_ref[...] = jnp.zeros_like(acc_e_ref)
        acc_r_ref[...] = jnp.zeros_like(acc_r_ref)

    # bf16 x bf16 -> f32 accumulation on the MXU.
    acc_e_ref[...] += jnp.dot(adj_e_ref[...], emb_e_ref[...],
                              preferred_element_type=jnp.float32)
    acc_r_ref[...] += jnp.dot(adj_r_ref[...], emb_r_ref[...],
                              preferred_element_type=jnp.float32)

    @pl.when(k == pl.num_programs(1) - 1)
    def _():
        # Post-scale by precomputed 1/row_count (sparse softmax of all-ones
        # values == multiplicity / nnz).  Single lane-dense 128-wide store.
        out_ref[...] = jnp.concatenate(
            [acc_e_ref[...] * inv_e_ref[...],
             acc_r_ref[...] * inv_r_ref[...]], axis=-1)


def gcn_avg_pallas(adj_e, adj_r, inv_e, inv_r, emb_e, emb_r, *, tm=128, tk=128):
    n, ke = adj_e.shape
    he = emb_e.shape[1]
    hr = emb_r.shape[1]
    assert adj_r.shape == (n, ke) and emb_e.shape[0] == ke and emb_r.shape[0] == ke
    assert n % tm == 0 and ke % tk == 0, "pad N / K to the tile sizes"

    grid = (n // tm, ke // tk)
    return pl.pallas_call(
        _gcn_avg_kernel,
        out_shape=jax.ShapeDtypeStruct((n, he + hr), jnp.float32),
        grid_spec=pltpu.PrefetchScalarGridSpec(
            num_scalar_prefetch=0,
            grid=grid,
            in_specs=[
                pl.BlockSpec((tm, tk), lambda i, k: (i, k)),   # ent adjacency
                pl.BlockSpec((tm, tk), lambda i, k: (i, k)),   # rel adjacency
                pl.BlockSpec((tm, 1), lambda i, k: (i, 0)),    # 1/cnt ent
                pl.BlockSpec((tm, 1), lambda i, k: (i, 0)),    # 1/cnt rel
                pl.BlockSpec((tk, he), lambda i, k: (k, 0)),   # ent embedding
                pl.BlockSpec((tk, hr), lambda i, k: (k, 0)),   # rel embedding
            ],
            out_specs=pl.BlockSpec((tm, he + hr), lambda i, k: (i, 0)),
            scratch_shapes=[pltpu.VMEM((tm, he), jnp.float32),
                            pltpu.VMEM((tm, hr), jnp.float32)],
        ),
        compiler_params=pltpu.CompilerParams(
            dimension_semantics=("parallel", "arbitrary")),
    )(adj_e, adj_r, inv_e, inv_r, emb_e, emb_r)


# ============================================================================
# Kernel 2: align_loss — tiled over N with a 2-phase reduction
#   phase 0: per-row sum / sumsq of the masked loss (mean, rsqrt(var))
#   phase 1: online logsumexp of lamb * standardized loss + tau
# l and r losses are stacked into one (2P, N) problem (same math, same mask).
# ============================================================================
def _align_loss_kernel(pos2_ref, lidx_ref, ridx_ref, x_ref, embt_ref, norme_ref,
                       lse_ref, s1_ref, s2_ref, m_ref, d_ref,
                       *, gamma, lamb, tau, n_total):
    phase = pl.program_id(1)
    ni = pl.program_id(2)
    nn = pl.num_programs(2)
    tp = x_ref.shape[0]
    tn = embt_ref.shape[1]

    x = x_ref[...]                                           # (tp, D) f32
    norm_x = jnp.sum(x * x, axis=-1, keepdims=True)          # (tp, 1)
    row_c = pos2_ref[...] + gamma - norm_x                   # (tp, 1)

    # (tp, D) @ (D, tn) on the MXU, bf16 operands, f32 accumulation.
    dot = jnp.dot(x.astype(jnp.bfloat16), embt_ref[...],
                  preferred_element_type=jnp.float32)        # (tp, tn)

    # mask = 1 - one_hot(l) - one_hot(r), built in-kernel from iota (global col)
    col = ni * tn + jax.lax.broadcasted_iota(jnp.int32, (tp, tn), 1)
    mask = (1.0
            - (col == lidx_ref[...]).astype(jnp.float32)
            - (col == ridx_ref[...]).astype(jnp.float32))

    # loss = (pos - (|x|^2 + |e|^2 - 2 x.e) + gamma) * mask
    loss = (row_c - norme_ref[...] + 2.0 * dot) * mask       # (tp, tn)

    @pl.when(phase == 0)
    def _():
        @pl.when(ni == 0)
        def _():
            s1_ref[...] = jnp.zeros_like(s1_ref)
            s2_ref[...] = jnp.zeros_like(s2_ref)

        s1_ref[...] += jnp.sum(loss, axis=-1, keepdims=True)
        s2_ref[...] += jnp.sum(loss * loss, axis=-1, keepdims=True)

        @pl.when(ni == nn - 1)
        def _():
            mu = s1_ref[...] * (1.0 / n_total)
            # biased variance (torch.std(..., unbiased=False)); eps guards a
            # degenerate constant row (NaN concern from the review).
            var = s2_ref[...] * (1.0 / n_total) - mu * mu
            s1_ref[...] = mu
            s2_ref[...] = jax.lax.rsqrt(jnp.maximum(var, 1e-12))

    @pl.when(phase == 1)
    def _():
        @pl.when(ni == 0)
        def _():
            m_ref[...] = jnp.full_like(m_ref, -jnp.inf)
            d_ref[...] = jnp.zeros_like(d_ref)

        # standardize with the stats from phase 0 (multiply by rsqrt, no divide)
        y = lamb * ((loss - s1_ref[...]) * s2_ref[...]) + tau
        m_prev = m_ref[...]
        m_new = jnp.maximum(m_prev, jnp.max(y, axis=-1, keepdims=True))
        d_ref[...] = (d_ref[...] * jnp.exp(m_prev - m_new)
                      + jnp.sum(jnp.exp(y - m_new), axis=-1, keepdims=True))
        m_ref[...] = m_new

        @pl.when(ni == nn - 1)
        def _():
            lse_ref[...] = m_ref[...] + jnp.log(d_ref[...])


def align_loss_pallas(pairs, emb, *, gamma=3.0, lamb=30.0, tau=10.0, tn=128):
    n, d = emb.shape
    assert n % tn == 0, "node_size must be a multiple of the N tile"

    l_idx = pairs[:, 0].astype(jnp.int32)
    r_idx = pairs[:, 1].astype(jnp.int32)
    l_emb = emb[l_idx]                                       # gather glue
    r_emb = emb[r_idx]
    pos = jnp.sum(jnp.square(l_emb - r_emb), axis=-1, keepdims=True)

    # Stack l and r problems into one (2P, ...) problem (shared mask / pos).
    x = jnp.concatenate([l_emb, r_emb], axis=0)              # (2P, D) f32
    pos2 = jnp.concatenate([pos, pos], axis=0)               # (2P, 1)
    lidx2 = jnp.concatenate([l_idx, l_idx], axis=0).reshape(-1, 1)
    ridx2 = jnp.concatenate([r_idx, r_idx], axis=0).reshape(-1, 1)

    emb_t = emb.T.astype(jnp.bfloat16)                       # (D, N) bf16 RHS
    norm_e = jnp.sum(emb * emb, axis=-1).reshape(1, -1)      # (1, N) f32

    p2 = x.shape[0]
    tp = p2 if p2 <= 128 else 128                            # P tile ("parallel")
    assert p2 % tp == 0
    grid = (p2 // tp, 2, n // tn)                            # (P tiles, phase, N tiles)

    kernel = functools.partial(_align_loss_kernel, gamma=float(gamma),
                               lamb=float(lamb), tau=float(tau),
                               n_total=float(n))
    lse = pl.pallas_call(
        kernel,
        out_shape=jax.ShapeDtypeStruct((p2, 1), jnp.float32),
        grid_spec=pltpu.PrefetchScalarGridSpec(
            num_scalar_prefetch=0,
            grid=grid,
            in_specs=[
                pl.BlockSpec((tp, 1), lambda pi, ph, ni: (pi, 0)),   # pos
                pl.BlockSpec((tp, 1), lambda pi, ph, ni: (pi, 0)),   # l idx
                pl.BlockSpec((tp, 1), lambda pi, ph, ni: (pi, 0)),   # r idx
                pl.BlockSpec((tp, d), lambda pi, ph, ni: (pi, 0)),   # stacked emb
                pl.BlockSpec((d, tn), lambda pi, ph, ni: (0, ni)),   # emb^T
                pl.BlockSpec((1, tn), lambda pi, ph, ni: (0, ni)),   # |emb|^2
            ],
            out_specs=pl.BlockSpec((tp, 1), lambda pi, ph, ni: (pi, 0)),
            scratch_shapes=[pltpu.VMEM((tp, 1), jnp.float32)] * 4,
        ),
        compiler_params=pltpu.CompilerParams(
            dimension_semantics=("parallel", "arbitrary", "arbitrary")),
    )(pos2, lidx2, ridx2, x, emb_t, norm_e)

    # mean over P of (l_lse + r_lse) == 2 * mean over the stacked 2P rows
    return 2.0 * jnp.mean(lse)


# ============================================================================
# Encoder_Model forward (JAX/Pallas)
# ============================================================================
def xavier_uniform(key, shape):
    fan_in, fan_out = shape[0], shape[1]
    bound = jnp.sqrt(6.0 / (fan_in + fan_out))
    return jax.random.uniform(key, shape, jnp.float32, -bound, bound)


def coo_to_dense_counts(indices, n_rows, n_cols):
    # multiplicity matrix: duplicate COO entries accumulate, exactly matching
    # torch.sparse.softmax over duplicate explicit entries (each gets 1/nnz).
    rows, cols = indices[0], indices[1]
    dense = jnp.zeros((n_rows, n_cols), jnp.float32)
    return dense.at[rows, cols].add(1.0)


def gcn_forward(ent_emb, rel_emb, ent_adj_counts, rel_adj_counts):
    ke = ent_adj_counts.shape[1]                  # node_size
    kr = rel_adj_counts.shape[1]                  # rel_size

    # Inverse row counts precomputed once (nnz including duplicates).
    cnt_e = jnp.sum(ent_adj_counts, axis=1, keepdims=True)
    cnt_r = jnp.sum(rel_adj_counts, axis=1, keepdims=True)
    inv_e = jnp.where(cnt_e > 0, 1.0 / jnp.maximum(cnt_e, 1.0), 0.0)
    inv_r = jnp.where(cnt_r > 0, 1.0 / jnp.maximum(cnt_r, 1.0), 0.0)

    # Pad the rel reduction axis up to the ent reduction axis with exact zeros
    # so a single fused (N, K) grid covers both matmuls.
    if kr < ke:
        rel_adj_counts = jnp.pad(rel_adj_counts, ((0, 0), (0, ke - kr)))
        rel_emb = jnp.pad(rel_emb, ((0, ke - kr), (0, 0)))

    adj_e = ent_adj_counts.astype(jnp.bfloat16)   # 0/1/small ints exact in bf16
    adj_r = rel_adj_counts.astype(jnp.bfloat16)
    emb_e = ent_emb.astype(jnp.bfloat16)
    emb_r = rel_emb.astype(jnp.bfloat16)

    # TODO(synk): NR_GraphAttention encoders not provided -> identity passthrough.
    # dropout_rate = 0.0 -> identity.
    return gcn_avg_pallas(adj_e, adj_r, inv_e, inv_r, emb_e, emb_r,
                          tm=128, tk=128)


def encoder_model_forward(train_pairs, ent_emb, rel_emb,
                          ent_adj_counts, rel_adj_counts, gamma=3.0):
    # `flag=False` in the original only re-initializes the embedding tables
    # (a parameter side-effect); the forward math below is identical.
    out_feature = gcn_forward(ent_emb, rel_emb, ent_adj_counts, rel_adj_counts)
    return align_loss_pallas(train_pairs, out_feature, gamma=gamma)


# ============================================================================
# Pure-JAX f32 reference (for a sanity tolerance check).
# ============================================================================
def reference_forward(train_pairs, ent_emb, rel_emb, ent_adj_counts,
                      rel_adj_counts, gamma=3.0, lamb=30.0, tau=10.0):
    def avg(adj_m, emb):
        cnt = jnp.sum(adj_m, axis=1, keepdims=True)
        w = adj_m / jnp.maximum(cnt, 1.0)
        return w @ emb

    emb = jnp.concatenate([avg(ent_adj_counts, ent_emb),
                           avg(rel_adj_counts, rel_emb)], axis=-1)
    n = emb.shape[0]
    l = train_pairs[:, 0]
    r = train_pairs[:, 1]
    l_emb, r_emb = emb[l], emb[r]
    pos = jnp.sum(jnp.square(l_emb - r_emb), axis=-1, keepdims=True)

    def sqdist(a, b):
        return (jnp.sum(a * a, 1, keepdims=True) + jnp.sum(b * b, 1)[None, :]
                - 2.0 * a @ b.T)

    mask = 1.0 - jax.nn.one_hot(l, n) - jax.nn.one_hot(r, n)

    def lse(x):
        m = jnp.max(x, axis=-1, keepdims=True)
        return (m + jnp.log(jnp.sum(jnp.exp(x - m), axis=-1, keepdims=True)))[:, 0]

    def side(e):
        x = (pos - sqdist(e, emb) + gamma) * mask
        mu = jnp.mean(x, -1, keepdims=True)
        sd = jnp.sqrt(jnp.mean((x - mu) ** 2, -1, keepdims=True))  # unbiased=False
        return lse(lamb * ((x - mu) / sd) + tau)

    return jnp.mean(side(l_emb) + side(r_emb))


# ============================================================================
if __name__ == "__main__":
    node_size = 256          # multiple of 128 -> exact N tiling in align_loss
    rel_size = 128
    node_hidden = 64
    rel_hidden = 64          # 64 + 64 = 128 -> lane-dense fused feature width
    n_ent_edges = 2048
    n_rel_edges = 1024
    n_pairs = 8

    key = jax.random.PRNGKey(0)
    keys = jax.random.split(key, 8)

    # parameters (deterministic xavier-uniform init)
    ent_emb = xavier_uniform(keys[0], (node_size, node_hidden))
    rel_emb = xavier_uniform(keys[1], (rel_size, rel_hidden))

    # synthetic COO adjacency structures (matching the module's sparse inputs)
    ent_adj = jnp.stack([
        jax.random.randint(keys[2], (n_ent_edges,), 0, node_size),
        jax.random.randint(keys[3], (n_ent_edges,), 0, node_size)])
    rel_adj = jnp.stack([
        jax.random.randint(keys[4], (n_rel_edges,), 0, node_size),
        jax.random.randint(keys[5], (n_rel_edges,), 0, rel_size)])

    ent_adj_counts = coo_to_dense_counts(ent_adj, node_size, node_size)
    rel_adj_counts = coo_to_dense_counts(rel_adj, node_size, rel_size)

    # training pairs (alignment seeds)
    train_pairs = jnp.stack([
        jax.random.randint(keys[6], (n_pairs,), 0, node_size),
        jax.random.randint(keys[7], (n_pairs,), 0, node_size)], axis=1)

    @jax.jit
    def forward(tp_, ee, re_, ea, ra):
        return encoder_model_forward(tp_, ee, re_, ea, ra, gamma=3.0)

    loss = forward(train_pairs, ent_emb, rel_emb, ent_adj_counts, rel_adj_counts)
    loss = jax.block_until_ready(loss)

    ref = reference_forward(train_pairs, ent_emb, rel_emb,
                            ent_adj_counts, rel_adj_counts)
    assert jnp.isfinite(loss), "loss is not finite"
    assert abs(float(loss) - float(ref)) <= 0.05 * abs(float(ref)) + 1.0, \
        (float(loss), float(ref))
    print("KERNEL_OK")
</pallas_src>

<mosaic_0001>
module attributes {stable_mosaic.version = 11 : i64} {
  func.func @_gcn_avg_kernel(%arg0: i32, %arg1: i32, %arg2: memref<128x128xbf16, #tpu.memory_space<vmem>>, %arg3: memref<128x128xbf16, #tpu.memory_space<vmem>>, %arg4: memref<128x1xf32, #tpu.memory_space<vmem>>, %arg5: memref<128x1xf32, #tpu.memory_space<vmem>>, %arg6: memref<128x64xbf16, #tpu.memory_space<vmem>>, %arg7: memref<128x64xbf16, #tpu.memory_space<vmem>>, %arg8: memref<128x128xf32, #tpu.memory_space<vmem>>, %arg9: memref<128x64xf32, #tpu.memory_space<vmem>>, %arg10: memref<128x64xf32, #tpu.memory_space<vmem>>) attributes {dimension_semantics = [#tpu.dimension_semantics<parallel>, #tpu.dimension_semantics<arbitrary>], iteration_bounds = array<i64: 2, 2>, scalar_prefetch = 0 : i64, scratch_operands = 2 : i64, tpu.core_type = #tpu.core_type<tc>, window_params = [{transform_indices = @transform_0, window_bounds = array<i64: 128, 128>}, {transform_indices = @transform_1, window_bounds = array<i64: 128, 128>}, {transform_indices = @transform_2, window_bounds = array<i64: 128, 1>}, {transform_indices = @transform_3, window_bounds = array<i64: 128, 1>}, {transform_indices = @transform_4, window_bounds = array<i64: 128, 64>}, {transform_indices = @transform_5, window_bounds = array<i64: 128, 64>}, {transform_indices = @transform_6, window_bounds = array<i64: 128, 128>}]} {
    %c0_i32 = arith.constant 0 : i32
    %0 = arith.cmpi eq, %arg1, %c0_i32 : i32
    %1 = arith.extui %0 : i1 to i32
    %c0_i32_0 = arith.constant 0 : i32
    %2 = arith.cmpi ne, %1, %c0_i32_0 : i32
    scf.if %2 {
      %cst_18 = arith.constant 0.000000e+00 : f32
      %18 = vector.broadcast %cst_18 : f32 to vector<128x64xf32>
      %c0_19 = arith.constant 0 : index
      %c0_20 = arith.constant 0 : index
      %19 = vector.load %arg9[%c0_19, %c0_20] : memref<128x64xf32, #tpu.memory_space<vmem>>, vector<128x64xf32>
      tpu.vector_store %arg9[%c0_19, %c0_20], %18 {strides = array<i32>} : memref<128x64xf32, #tpu.memory_space<vmem>>, vector<128x64xf32>,
      %cst_21 = arith.constant 0.000000e+00 : f32
      %20 = vector.broadcast %cst_21 : f32 to vector<128x64xf32>
      %c0_22 = arith.constant 0 : index
      %c0_23 = arith.constant 0 : index
      %21 = vector.load %arg10[%c0_22, %c0_23] : memref<128x64xf32, #tpu.memory_space<vmem>>, vector<128x64xf32>
      tpu.vector_store %arg10[%c0_22, %c0_23], %20 {strides = array<i32>} : memref<128x64xf32, #tpu.memory_space<vmem>>, vector<128x64xf32>,
    } else {
    }
    %c0 = arith.constant 0 : index
    %c0_1 = arith.constant 0 : index
    %3 = vector.load %arg9[%c0, %c0_1] : memref<128x64xf32, #tpu.memory_space<vmem>>, vector<128x64xf32>
    %c0_2 = arith.constant 0 : index
    %c0_3 = arith.constant 0 : index
    %4 = vector.load %arg2[%c0_2, %c0_3] : memref<128x128xbf16, #tpu.memory_space<vmem>>, vector<128x128xbf16>
    %c0_4 = arith.constant 0 : index
    %c0_5 = arith.constant 0 : index
    %5 = vector.load %arg6[%c0_4, %c0_5] : memref<128x64xbf16, #tpu.memory_space<vmem>>, vector<128x64xbf16>
    %cst = arith.constant dense<0.000000e+00> : vector<128x64xf32>
    %6 = tpu.matmul %4, %5, %cst {dimension_numbers = #tpu.dot_dimension_numbers<[1], [0], [0], [1], [0, 0, 1, 1], [], []>} : vector<128x128xbf16>, vector<128x64xbf16>, vector<128x64xf32> -> vector<128x64xf32>
    %7 = arith.addf %3, %6 : vector<128x64xf32>
    %c0_6 = arith.constant 0 : index
    %c0_7 = arith.constant 0 : index
    %8 = vector.load %arg9[%c0_6, %c0_7] : memref<128x64xf32, #tpu.memory_space<vmem>>, vector<128x64xf32>
    tpu.vector_store %arg9[%c0_6, %c0_7], %7 {strides = array<i32>} : memref<128x64xf32, #tpu.memory_space<vmem>>, vector<128x64xf32>,
    %c0_8 = arith.constant 0 : index
    %c0_9 = arith.constant 0 : index
    %9 = vector.load %arg10[%c0_8, %c0_9] : memref<128x64xf32, #tpu.memory_space<vmem>>, vector<128x64xf32>
    %c0_10 = arith.constant 0 : index
    %c0_11 = arith.constant 0 : index
    %10 = vector.load %arg3[%c0_10, %c0_11] : memref<128x128xbf16, #tpu.memory_space<vmem>>, vector<128x128xbf16>
    %c0_12 = arith.constant 0 : index
    %c0_13 = arith.constant 0 : index
    %11 = vector.load %arg7[%c0_12, %c0_13] : memref<128x64xbf16, #tpu.memory_space<vmem>>, vector<128x64xbf16>
    %cst_14 = arith.constant dense<0.000000e+00> : vector<128x64xf32>
    %12 = tpu.matmul %10, %11, %cst_14 {dimension_numbers = #tpu.dot_dimension_numbers<[1], [0], [0], [1], [0, 0, 1, 1], [], []>} : vector<128x128xbf16>, vector<128x64xbf16>, vector<128x64xf32> -> vector<128x64xf32>
    %13 = arith.addf %9, %12 : vector<128x64xf32>
    %c0_15 = arith.constant 0 : index
    %c0_16 = arith.constant 0 : index
    %14 = vector.load %arg10[%c0_15, %c0_16] : memref<128x64xf32, #tpu.memory_space<vmem>>, vector<128x64xf32>
    tpu.vector_store %arg10[%c0_15, %c0_16], %13 {strides = array<i32>} : memref<128x64xf32, #tpu.memory_space<vmem>>, vector<128x64xf32>,
    %c1_i32 = arith.constant 1 : i32
    %15 = arith.cmpi eq, %arg1, %c1_i32 : i32
    %16 = arith.extui %15 : i1 to i32
    %c0_i32_17 = arith.constant 0 : i32
    %17 = arith.cmpi ne, %16, %c0_i32_17 : i32
    scf.if %17 {
      %c0_18 = arith.constant 0 : index
      %c0_19 = arith.constant 0 : index
      %18 = vector.load %arg9[%c0_18, %c0_19] : memref<128x64xf32, #tpu.memory_space<vmem>>, vector<128x64xf32>
      %c0_20 = arith.constant 0 : index
      %c0_21 = arith.constant 0 : index
      %19 = vector.load %arg4[%c0_20, %c0_21] : memref<128x1xf32, #tpu.memory_space<vmem>>, vector<128x1xf32>
      %20 = vector.broadcast %19 : vector<128x1xf32> to vector<128x64xf32>
      %21 = arith.mulf %18, %20 : vector<128x64xf32>
      %c0_22 = arith.constant 0 : index
      %c0_23 = arith.constant 0 : index
      %22 = vector.load %arg10[%c0_22, %c0_23] : memref<128x64xf32, #tpu.memory_space<vmem>>, vector<128x64xf32>
      %c0_24 = arith.constant 0 : index
      %c0_25 = arith.constant 0 : index
      %23 = vector.load %arg5[%c0_24, %c0_25] : memref<128x1xf32, #tpu.memory_space<vmem>>, vector<128x1xf32>
      %24 = vector.broadcast %23 : vector<128x1xf32> to vector<128x64xf32>
      %25 = arith.mulf %22, %24 : vector<128x64xf32>
      %26 = tpu.concatenate %21, %25 in 1 : vector<128x64xf32>, vector<128x64xf32> -> vector<128x128xf32>
      %c0_26 = arith.constant 0 : index
      %c0_27 = arith.constant 0 : index
      %27 = vector.load %arg8[%c0_26, %c0_27] : memref<128x128xf32, #tpu.memory_space<vmem>>, vector<128x128xf32>
      tpu.vector_store %arg8[%c0_26, %c0_27], %26 {strides = array<i32>} : memref<128x128xf32, #tpu.memory_space<vmem>>, vector<128x128xf32>,
    } else {
    }
    return
  }
  func.func @transform_0(%arg0: i32, %arg1: i32) -> (i32, i32) {
    %c0_i32 = arith.constant 0 : i32
    return %arg0, %arg1 : i32, i32
  }
  func.func @transform_1(%arg0: i32, %arg1: i32) -> (i32, i32) {
    %c0_i32 = arith.constant 0 : i32
    return %arg0, %arg1 : i32, i32
  }
  func.func @transform_2(%arg0: i32, %arg1: i32) -> (i32, i32) {
    %c0_i32 = arith.constant 0 : i32
    %c0_i32_0 = arith.constant 0 : i32
    return %arg0, %c0_i32 : i32, i32
  }
  func.func @transform_3(%arg0: i32, %arg1: i32) -> (i32, i32) {
    %c0_i32 = arith.constant 0 : i32
    %c0_i32_0 = arith.constant 0 : i32
    return %arg0, %c0_i32 : i32, i32
  }
  func.func @transform_4(%arg0: i32, %arg1: i32) -> (i32, i32) {
    %c0_i32 = arith.constant 0 : i32
    %c0_i32_0 = arith.constant 0 : i32
    return %arg1, %c0_i32 : i32, i32
  }
  func.func @transform_5(%arg0: i32, %arg1: i32) -> (i32, i32) {
    %c0_i32 = arith.constant 0 : i32
    %c0_i32_0 = arith.constant 0 : i32
    return %arg1, %c0_i32 : i32, i32
  }
  func.func @transform_6(%arg0: i32, %arg1: i32) -> (i32, i32) {
    %c0_i32 = arith.constant 0 : i32
    %c0_i32_0 = arith.constant 0 : i32
    return %arg0, %c0_i32 : i32, i32
  }
}

module attributes {stable_mosaic.version = 11 : i64} {
  func.func @_align_loss_kernel(%arg0: i32, %arg1: i32, %arg2: i32, %arg3: memref<16x1xf32, #tpu.memory_space<vmem>>, %arg4: memref<16x1xi32, #tpu.memory_space<vmem>>, %arg5: memref<16x1xi32, #tpu.memory_space<vmem>>, %arg6: memref<16x128xf32, #tpu.memory_space<vmem>>, %arg7: memref<128x128xbf16, #tpu.memory_space<vmem>>, %arg8: memref<1x128xf32, #tpu.memory_space<vmem>>, %arg9: memref<16x1xf32, #tpu.memory_space<vmem>>, %arg10: memref<16x1xf32, #tpu.memory_space<vmem>>, %arg11: memref<16x1xf32, #tpu.memory_space<vmem>>, %arg12: memref<16x1xf32, #tpu.memory_space<vmem>>, %arg13: memref<16x1xf32, #tpu.memory_space<vmem>>) attributes {dimension_semantics = [#tpu.dimension_semantics<parallel>, #tpu.dimension_semantics<arbitrary>, #tpu.dimension_semantics<arbitrary>], iteration_bounds = array<i64: 1, 2, 2>, scalar_prefetch = 0 : i64, scratch_operands = 4 : i64, tpu.core_type = #tpu.core_type<tc>, window_params = [{transform_indices = @transform_0, window_bounds = array<i64: 16, 1>}, {transform_indices = @transform_1, window_bounds = array<i64: 16, 1>}, {transform_indices = @transform_2, window_bounds = array<i64: 16, 1>}, {transform_indices = @transform_3, window_bounds = array<i64: 16, 128>}, {transform_indices = @transform_4, window_bounds = array<i64: 128, 128>}, {transform_indices = @transform_5, window_bounds = array<i64: 1, 128>}, {transform_indices = @transform_6, window_bounds = array<i64: 16, 1>}]} {
    %c0 = arith.constant 0 : index
    %c0_0 = arith.constant 0 : index
    %0 = vector.load %arg6[%c0, %c0_0] : memref<16x128xf32, #tpu.memory_space<vmem>>, vector<16x128xf32>
    %1 = arith.mulf %0, %0 : vector<16x128xf32>
    %cst = arith.constant dense<0.000000e+00> : vector<16xf32>
    %2 = vector.multi_reduction <add>, %1, %cst [1] : vector<16x128xf32> to vector<16xf32>
    %3 = vector.shape_cast %2 : vector<16xf32> to vector<16x1xf32>
    %c0_1 = arith.constant 0 : index
    %c0_2 = arith.constant 0 : index
    %4 = vector.load %arg3[%c0_1, %c0_2] : memref<16x1xf32, #tpu.memory_space<vmem>>, vector<16x1xf32>
    %cst_3 = arith.constant 3.000000e+00 : f32
    %5 = vector.broadcast %cst_3 : f32 to vector<16x1xf32>
    %6 = arith.addf %4, %5 : vector<16x1xf32>
    %7 = arith.subf %6, %3 : vector<16x1xf32>
    %8 = arith.truncf %0 : vector<16x128xf32> to vector<16x128xbf16>
    %c0_4 = arith.constant 0 : index
    %c0_5 = arith.constant 0 : index
    %9 = vector.load %arg7[%c0_4, %c0_5] : memref<128x128xbf16, #tpu.memory_space<vmem>>, vector<128x128xbf16>
    %cst_6 = arith.constant dense<0.000000e+00> : vector<16x128xf32>
    %10 = tpu.matmul %8, %9, %cst_6 {dimension_numbers = #tpu.dot_dimension_numbers<[1], [0], [0], [1], [0, 0, 1, 1], [], []>} : vector<16x128xbf16>, vector<128x128xbf16>, vector<16x128xf32> -> vector<16x128xf32>
    %c128_i32 = arith.constant 128 : i32
    %11 = arith.muli %arg2, %c128_i32 : i32
    %12 = tpu.iota {dimensions = array<i32: 1>} : vector<16x128xi32>
    %13 = vector.broadcast %11 : i32 to vector<16x128xi32>
    %14 = arith.addi %13, %12 : vector<16x128xi32>
    %c0_7 = arith.constant 0 : index
    %c0_8 = arith.constant 0 : index
    %15 = vector.load %arg4[%c0_7, %c0_8] : memref<16x1xi32, #tpu.memory_space<vmem>>, vector<16x1xi32>
    %16 = vector.broadcast %15 : vector<16x1xi32> to vector<16x128xi32>
    %17 = arith.cmpi eq, %14, %16 : vector<16x128xi32>
    %18 = arith.extui %17 : vector<16x128xi1> to vector<16x128xi32>
    %19 = arith.sitofp %18 : vector<16x128xi32> to vector<16x128xf32>
    %cst_9 = arith.constant 1.000000e+00 : f32
    %20 = vector.broadcast %cst_9 : f32 to vector<16x128xf32>
    %21 = arith.subf %20, %19 : vector<16x128xf32>
    %c0_10 = arith.constant 0 : index
    %c0_11 = arith.constant 0 : index
    %22 = vector.load %arg5[%c0_10, %c0_11] : memref<16x1xi32, #tpu.memory_space<vmem>>, vector<16x1xi32>
    %23 = vector.broadcast %22 : vector<16x1xi32> to vector<16x128xi32>
    %24 = arith.cmpi eq, %14, %23 : vector<16x128xi32>
    %25 = arith.extui %24 : vector<16x128xi1> to vector<16x128xi32>
    %26 = arith.sitofp %25 : vector<16x128xi32> to vector<16x128xf32>
    %27 = arith.subf %21, %26 : vector<16x128xf32>
    %c0_12 = arith.constant 0 : index
    %c0_13 = arith.constant 0 : index
    %28 = vector.load %arg8[%c0_12, %c0_13] : memref<1x128xf32, #tpu.memory_space<vmem>>, vector<1x128xf32>
    %29 = vector.broadcast %7 : vector<16x1xf32> to vector<16x128xf32>
    %30 = vector.broadcast %28 : vector<1x128xf32> to vector<16x128xf32>
    %31 = arith.subf %29, %30 : vector<16x128xf32>
    %cst_14 = arith.constant 2.000000e+00 : f32
    %32 = vector.broadcast %cst_14 : f32 to vector<16x128xf32>
    %33 = arith.mulf %32, %10 : vector<16x128xf32>
    %34 = arith.addf %31, %33 : vector<16x128xf32>
    %35 = arith.mulf %34, %27 : vector<16x128xf32>
    %c0_i32 = arith.constant 0 : i32
    %36 = arith.cmpi eq, %arg1, %c0_i32 : i32
    %37 = arith.extui %36 : i1 to i32
    %c0_i32_15 = arith.constant 0 : i32
    %38 = arith.cmpi ne, %37, %c0_i32_15 : i32
    scf.if %38 {
      %c0_i32_17 = arith.constant 0 : i32
      %42 = arith.cmpi eq, %arg2, %c0_i32_17 : i32
      %43 = arith.extui %42 : i1 to i32
      %c0_i32_18 = arith.constant 0 : i32
      %44 = arith.cmpi ne, %43, %c0_i32_18 : i32
      scf.if %44 {
        %cst_31 = arith.constant 0.000000e+00 : f32
        %59 = vector.broadcast %cst_31 : f32 to vector<16x1xf32>
        %c0_32 = arith.constant 0 : index
        %c0_33 = arith.constant 0 : index
        %60 = vector.load %arg10[%c0_32, %c0_33] : memref<16x1xf32, #tpu.memory_space<vmem>>, vector<16x1xf32>
        tpu.vector_store %arg10[%c0_32, %c0_33], %59 {strides = array<i32>} : memref<16x1xf32, #tpu.memory_space<vmem>>, vector<16x1xf32>,
        %cst_34 = arith.constant 0.000000e+00 : f32
        %61 = vector.broadcast %cst_34 : f32 to vector<16x1xf32>
        %c0_35 = arith.constant 0 : index
        %c0_36 = arith.constant 0 : index
        %62 = vector.load %arg11[%c0_35, %c0_36] : memref<16x1xf32, #tpu.memory_space<vmem>>, vector<16x1xf32>
        tpu.vector_store %arg11[%c0_35, %c0_36], %61 {strides = array<i32>} : memref<16x1xf32, #tpu.memory_space<vmem>>, vector<16x1xf32>,
      } else {
      }
      %c0_19 = arith.constant 0 : index
      %c0_20 = arith.constant 0 : index
      %45 = vector.load %arg10[%c0_19, %c0_20] : memref<16x1xf32, #tpu.memory_space<vmem>>, vector<16x1xf32>
      %cst_21 = arith.constant dense<0.000000e+00> : vector<16xf32>
      %46 = vector.multi_reduction <add>, %35, %cst_21 [1] : vector<16x128xf32> to vector<16xf32>
      %47 = vector.shape_cast %46 : vector<16xf32> to vector<16x1xf32>
      %48 = arith.addf %45, %47 : vector<16x1xf32>
      %c0_22 = arith.constant 0 : index
      %c0_23 = arith.constant 0 : index
      %49 = vector.load %arg10[%c0_22, %c0_23] : memref<16x1xf32, #tpu.memory_space<vmem>>, vector<16x1xf32>
      tpu.vector_store %arg10[%c0_22, %c0_23], %48 {strides = array<i32>} : memref<16x1xf32, #tpu.memory_space<vmem>>, vector<16x1xf32>,
      %c0_24 = arith.constant 0 : index
      %c0_25 = arith.constant 0 : index
      %50 = vector.load %arg11[%c0_24, %c0_25] : memref<16x1xf32, #tpu.memory_space<vmem>>, vector<16x1xf32>
      %51 = arith.mulf %35, %35 : vector<16x128xf32>
      %cst_26 = arith.constant dense<0.000000e+00> : vector<16xf32>
      %52 = vector.multi_reduction <add>, %51, %cst_26 [1] : vector<16x128xf32> to vector<16xf32>
      %53 = vector.shape_cast %52 : vector<16xf32> to vector<16x1xf32>
      %54 = arith.addf %50, %53 : vector<16x1xf32>
      %c0_27 = arith.constant 0 : index
      %c0_28 = arith.constant 0 : index
      %55 = vector.load %arg11[%c0_27, %c0_28] : memref<16x1xf32, #tpu.memory_space<vmem>>, vector<16x1xf32>
      tpu.vector_store %arg11[%c0_27, %c0_28], %54 {strides = array<i32>} : memref<16x1xf32, #tpu.memory_space<vmem>>, vector<16x1xf32>,
      %c1_i32_29 = arith.constant 1 : i32
      %56 = arith.cmpi eq, %arg2, %c1_i32_29 : i32
      %57 = arith.extui %56 : i1 to i32
      %c0_i32_30 = arith.constant 0 : i32
      %58 = arith.cmpi ne, %57, %c0_i32_30 : i32
      scf.if %58 {
        %c0_31 = arith.constant 0 : index
        %c0_32 = arith.constant 0 : index
        %59 = vector.load %arg10[%c0_31, %c0_32] : memref<16x1xf32, #tpu.memory_space<vmem>>, vector<16x1xf32>
        %cst_33 = arith.constant 3.906250e-03 : f32
        %60 = vector.broadcast %cst_33 : f32 to vector<16x1xf32>
        %61 = arith.mulf %59, %60 : vector<16x1xf32>
        %c0_34 = arith.constant 0 : index
        %c0_35 = arith.constant 0 : index
        %62 = vector.load %arg11[%c0_34, %c0_35] : memref<16x1xf32, #tpu.memory_space<vmem>>, vector<16x1xf32>
        %cst_36 = arith.constant 3.906250e-03 : f32
        %63 = vector.broadcast %cst_36 : f32 to vector<16x1xf32>
        %64 = arith.mulf %62, %63 : vector<16x1xf32>
        %65 = arith.mulf %61, %61 : vector<16x1xf32>
        %66 = arith.subf %64, %65 : vector<16x1xf32>
        %c0_37 = arith.constant 0 : index
        %c0_38 = arith.constant 0 : index
        %67 = vector.load %arg10[%c0_37, %c0_38] : memref<16x1xf32, #tpu.memory_space<vmem>>, vector<16x1xf32>
        tpu.vector_store %arg10[%c0_37, %c0_38], %61 {strides = array<i32>} : memref<16x1xf32, #tpu.memory_space<vmem>>, vector<16x1xf32>,
        %cst_39 = arith.constant 9.99999996E-13 : f32
        %68 = vector.broadcast %cst_39 : f32 to vector<16x1xf32>
        %69 = arith.maximumf %66, %68 : vector<16x1xf32>
        %70 = math.rsqrt %69 : vector<16x1xf32>
        %c0_40 = arith.constant 0 : index
        %c0_41 = arith.constant 0 : index
        %71 = vector.load %arg11[%c0_40, %c0_41] : memref<16x1xf32, #tpu.memory_space<vmem>>, vector<16x1xf32>
        tpu.vector_store %arg11[%c0_40, %c0_41], %70 {strides = array<i32>} : memref<16x1xf32, #tpu.memory_space<vmem>>, vector<16x1xf32>,
      } else {
      }
    } else {
    }
    %c1_i32 = arith.constant 1 : i32
    %39 = arith.cmpi eq, %arg1, %c1_i32 : i32
    %40 = arith.extui %39 : i1 to i32
    %c0_i32_16 = arith.constant 0 : i32
    %41 = arith.cmpi ne, %40, %c0_i32_16 : i32
    scf.if %41 {
      %c0_i32_17 = arith.constant 0 : i32
      %42 = arith.cmpi eq, %arg2, %c0_i32_17 : i32
      %43 = arith.extui %42 : i1 to i32
      %c0_i32_18 = arith.constant 0 : i32
      %44 = arith.cmpi ne, %43, %c0_i32_18 : i32
      scf.if %44 {
        %cst_37 = arith.constant 0xFF800000 : f32
        %74 = vector.broadcast %cst_37 : f32 to vector<16x1xf32>
        %c0_38 = arith.constant 0 : index
        %c0_39 = arith.constant 0 : index
        %75 = vector.load %arg12[%c0_38, %c0_39] : memref<16x1xf32, #tpu.memory_space<vmem>>, vector<16x1xf32>
        tpu.vector_store %arg12[%c0_38, %c0_39], %74 {strides = array<i32>} : memref<16x1xf32, #tpu.memory_space<vmem>>, vector<16x1xf32>,
        %cst_40 = arith.constant 0.000000e+00 : f32
        %76 = vector.broadcast %cst_40 : f32 to vector<16x1xf32>
        %c0_41 = arith.constant 0 : index
        %c0_42 = arith.constant 0 : index
        %77 = vector.load %arg13[%c0_41, %c0_42] : memref<16x1xf32, #tpu.memory_space<vmem>>, vector<16x1xf32>
        tpu.vector_store %arg13[%c0_41, %c0_42], %76 {strides = array<i32>} : memref<16x1xf32, #tpu.memory_space<vmem>>, vector<16x1xf32>,
      } else {
      }
      %c0_19 = arith.constant 0 : index
      %c0_20 = arith.constant 0 : index
      %45 = vector.load %arg10[%c0_19, %c0_20] : memref<16x1xf32, #tpu.memory_space<vmem>>, vector<16x1xf32>
      %46 = vector.broadcast %45 : vector<16x1xf32> to vector<16x128xf32>
      %47 = arith.subf %35, %46 : vector<16x128xf32>
      %c0_21 = arith.constant 0 : index
      %c0_22 = arith.constant 0 : index
      %48 = vector.load %arg11[%c0_21, %c0_22] : memref<16x1xf32, #tpu.memory_space<vmem>>, vector<16x1xf32>
      %49 = vector.broadcast %48 : vector<16x1xf32> to vector<16x128xf32>
      %50 = arith.mulf %47, %49 : vector<16x128xf32>
      %cst_23 = arith.constant 3.000000e+01 : f32
      %51 = vector.broadcast %cst_23 : f32 to vector<16x128xf32>
      %52 = arith.mulf %51, %50 : vector<16x128xf32>
      %cst_24 = arith.constant 1.000000e+01 : f32
      %53 = vector.broadcast %cst_24 : f32 to vector<16x128xf32>
      %54 = arith.addf %52, %53 : vector<16x128xf32>
      %c0_25 = arith.constant 0 : index
      %c0_26 = arith.constant 0 : index
      %55 = vector.load %arg12[%c0_25, %c0_26] : memref<16x1xf32, #tpu.memory_space<vmem>>, vector<16x1xf32>
      %cst_27 = arith.constant dense<0xFF800000> : vector<16xf32>
      %56 = vector.multi_reduction <maximumf>, %54, %cst_27 [1] : vector<16x128xf32> to vector<16xf32>
      %57 = vector.shape_cast %56 : vector<16xf32> to vector<16x1xf32>
      %58 = arith.maximumf %55, %57 : vector<16x1xf32>
      %c0_28 = arith.constant 0 : index
      %c0_29 = arith.constant 0 : index
      %59 = vector.load %arg13[%c0_28, %c0_29] : memref<16x1xf32, #tpu.memory_space<vmem>>, vector<16x1xf32>
      %60 = arith.subf %55, %58 : vector<16x1xf32>
      %61 = math.exp %60 : vector<16x1xf32>
      %62 = arith.mulf %59, %61 : vector<16x1xf32>
      %63 = vector.broadcast %58 : vector<16x1xf32> to vector<16x128xf32>
      %64 = arith.subf %54, %63 : vector<16x128xf32>
      %65 = math.exp %64 : vector<16x128xf32>
      %cst_30 = arith.constant dense<0.000000e+00> : vector<16xf32>
      %66 = vector.multi_reduction <add>, %65, %cst_30 [1] : vector<16x128xf32> to vector<16xf32>
      %67 = vector.shape_cast %66 : vector<16xf32> to vector<16x1xf32>
      %68 = arith.addf %62, %67 : vector<16x1xf32>
      %c0_31 = arith.constant 0 : index
      %c0_32 = arith.constant 0 : index
      %69 = vector.load %arg13[%c0_31, %c0_32] : memref<16x1xf32, #tpu.memory_space<vmem>>, vector<16x1xf32>
      tpu.vector_store %arg13[%c0_31, %c0_32], %68 {strides = array<i32>} : memref<16x1xf32, #tpu.memory_space<vmem>>, vector<16x1xf32>,
      %c0_33 = arith.constant 0 : index
      %c0_34 = arith.constant 0 : index
      %70 = vector.load %arg12[%c0_33, %c0_34] : memref<16x1xf32, #tpu.memory_space<vmem>>, vector<16x1xf32>
      tpu.vector_store %arg12[%c0_33, %c0_34], %58 {strides = array<i32>} : memref<16x1xf32, #tpu.memory_space<vmem>>, vector<16x1xf32>,
      %c1_i32_35 = arith.constant 1 : i32
      %71 = arith.cmpi eq, %arg2, %c1_i32_35 : i32
      %72 = arith.extui %71 : i1 to i32
      %c0_i32_36 = arith.constant 0 : i32
      %73 = arith.cmpi ne, %72, %c0_i32_36 : i32
      scf.if %73 {
        %c0_37 = arith.constant 0 : index
        %c0_38 = arith.constant 0 : index
        %74 = vector.load %arg12[%c0_37, %c0_38] : memref<16x1xf32, #tpu.memory_space<vmem>>, vector<16x1xf32>
        %c0_39 = arith.constant 0 : index
        %c0_40 = arith.constant 0 : index
        %75 = vector.load %arg13[%c0_39, %c0_40] : memref<16x1xf32, #tpu.memory_space<vmem>>, vector<16x1xf32>
        %76 = math.log %75 : vector<16x1xf32>
        %77 = arith.addf %74, %76 : vector<16x1xf32>
        %c0_41 = arith.constant 0 : index
        %c0_42 = arith.constant 0 : index
        %78 = vector.load %arg9[%c0_41, %c0_42] : memref<16x1xf32, #tpu.memory_space<vmem>>, vector<16x1xf32>
        tpu.vector_store %arg9[%c0_41, %c0_42], %77 {strides = array<i32>} : memref<16x1xf32, #tpu.memory_space<vmem>>, vector<16x1xf32>,
      } else {
      }
    } else {
    }
    return
  }
  func.func @transform_0(%arg0: i32, %arg1: i32, %arg2: i32) -> (i32, i32) {
    %c0_i32 = arith.constant 0 : i32
    %c0_i32_0 = arith.constant 0 : i32
    return %arg0, %c0_i32 : i32, i32
  }
  func.func @transform_1(%arg0: i32, %arg1: i32, %arg2: i32) -> (i32, i32) {
    %c0_i32 = arith.constant 0 : i32
    %c0_i32_0 = arith.constant 0 : i32
    return %arg0, %c0_i32 : i32, i32
  }
  func.func @transform_2(%arg0: i32, %arg1: i32, %arg2: i32) -> (i32, i32) {
    %c0_i32 = arith.constant 0 : i32
    %c0_i32_0 = arith.constant 0 : i32
    return %arg0, %c0_i32 : i32, i32
  }
  func.func @transform_3(%arg0: i32, %arg1: i32, %arg2: i32) -> (i32, i32) {
    %c0_i32 = arith.constant 0 : i32
    %c0_i32_0 = arith.constant 0 : i32
    return %arg0, %c0_i32 : i32, i32
  }
  func.func @transform_4(%arg0: i32, %arg1: i32, %arg2: i32) -> (i32, i32) {
    %c0_i32 = arith.constant 0 : i32
    %c0_i32_0 = arith.constant 0 : i32
    return %c0_i32, %arg2 : i32, i32
  }
  func.func @transform_5(%arg0: i32, %arg1: i32, %arg2: i32) -> (i32, i32) {
    %c0_i32 = arith.constant 0 : i32
    %c0_i32_0 = arith.constant 0 : i32
    return %c0_i32, %arg2 : i32, i32
  }
  func.func @transform_6(%arg0: i32, %arg1: i32, %arg2: i32) -> (i32, i32) {
    %c0_i32 = arith.constant 0 : i32
    %c0_i32_0 = arith.constant 0 : i32
    return %arg0, %c0_i32 : i32, i32
  }
}

</mosaic_0001>

<llo_original>
// kernel: forward.3
$region0: #{forward.3}
  #allocation0 [shape = 'u32[]', space=smem, size = 0x4, offset = 0x4, fixed_abs, tag = 'smem constant byte address 0x4 - core index']
  #allocation1 [shape = 'u32[144,128]{1,0:T(1,128)}', space=vmem, size = 0x12000, scoped, tag = 'internal scratch']
  #allocation2 [shape = 'f32[16,1]{1,0:T(8,128)}', space=vmem, size = 0x2000, scoped, tag = 'scratch operand']
  #allocation3 [shape = 'f32[16,1]{1,0:T(8,128)}', space=vmem, size = 0x2000, scoped, tag = 'scratch operand']
  #allocation4 [shape = 'f32[16,1]{1,0:T(8,128)}', space=vmem, size = 0x2000, scoped, tag = 'scratch operand']
  #allocation5 [shape = 'f32[16,1]{1,0:T(8,128)}', space=vmem, size = 0x2000, scoped, tag = 'scratch operand']
  %s0 = inlined_call_operand.vmem [shape: f32[16,1], index: 0, kind: input, shape index: {}]
  %s1 = inlined_call_operand.vmem [shape: s32[16,1], index: 1, kind: input, shape index: {}]
  %s2 = inlined_call_operand.vmem [shape: s32[16,1], index: 2, kind: input, shape index: {}]
  %s3 = inlined_call_operand.vmem [shape: f32[16,128], index: 3, kind: input, shape index: {}]
  %s4 = inlined_call_operand.vmem [shape: bf16[128,256], index: 4, kind: input, shape index: {}]
  %s5 = inlined_call_operand.vmem [shape: f32[1,256], index: 5, kind: input, shape index: {}]
  %s6 = inlined_call_operand.vmem [shape: f32[16,1], index: 6, kind: output, shape index: {}]
  %s7 = sld [smem:[#allocation0]]
  $region122: #{forward.3} parent=0
    _
  %s9 = ssub.s32 1, %s7
  %s10 = scalar_select 0, %s9, %s7
  $region1: #{forward.3} parent=0
    #allocation6 [shape = 'u8[65536]{0}', space=vmem, size = 0x10000, scoped, tag = 'input window, operand 4']
    loop: start=0, step=1, limit=6
    $region2: #{forward.3} parent=1 // loop_pre_header
      _
    $region3: #{forward.3} parent=1 // loop_header
      %s12 = sphi 0, %s16
      %p13 = scmp.ge.s32.totalorder %s12, 6
      %s19 = sphi 0, %s38
      %s20 = sphi 0, %s34
      %s21 = sphi 0, %s30
      %s22 = sphi 0, %s19
      %s23 = sphi 0, %s20
      %s24 = sphi 0, %s21
      %s25 = sphi 0, %s22
      %s26 = sphi 0, %s23
      %s27 = sphi 0, %s24
      %s41 = sphi 0, %s43
      %s44 = sphi 0, %s41
      %s45 = sphi 0, %s44
      %s61 = sphi 0, %s45
      %s67 = sphi 0, %s69
      %s70 = sphi 0, %s67
      %s71 = sphi 0, %s70
      %s87 = sphi 0, %s71
      %s93 = sphi 0, %s95
      %s96 = sphi 0, %s93
      %s97 = sphi 0, %s96
      %s113 = sphi 0, %s97
      %s119 = sphi 0, %s121
      %s122 = sphi 0, %s119
      %s123 = sphi 0, %s122
      %s139 = sphi 0, %s123
      %s145 = sphi 0, %s147
      %s148 = sphi 0, %s145
      %s149 = sphi 0, %s148
      %s165 = sphi 0, %s149
      %s171 = sphi 0, %s173
      %s174 = sphi 0, %s171
      %s175 = sphi 0, %s174
      %s191 = sphi 0, %s175
      %s197 = sphi 0, %s199
      %s200 = sphi 0, %s197
      %s201 = sphi 0, %s200
      %s217 = sphi 0, %s201
    $region4: #{forward.3} parent=1 // loop_header_branch
      %15 = sbr.rel (%p13) target = $region8
    $region5: #{forward.3} parent=1 // loop_body
      %s17 = ssub.s32 %s12, 1
      %s18 = ssub.s32 %s12, 2
      %s28 = sadd.s32 1, %s21
      %p29 = scmp.ge.s32.totalorder %s28, 2
      %s30 = scalar_select %p29, 0, %s28
      %s31 = sadd.s32 1, %s20
      %s32 = scalar_select %p29, %s31, %s20
      %p33 = scmp.ge.s32.totalorder %s32, 2
      %s34 = scalar_select %p33, 0, %s32
      %s35 = sadd.s32 1, %s19
      %s36 = scalar_select %p33, %s35, %s19
      %p37 = scmp.ge.s32.totalorder %s36, 1
      %s38 = scalar_select %p37, 0, %s36
      %s39 = ssub.s32 %s19, %s38
      %p40 = scmp.eq.s32.totalorder %s39, 0
      %s42 = sadd.s32 %s41, 1
      %s43 = scalar_select %p40, %s41, %s42
      %p46 = pneg %p40
      %p47 = scmp.eq.s32.totalorder %s12, 3
      %p48 = por %p46, %p47
      %p49 = scmp.ne.s32.totalorder %s41, %s44
      %p50 = scmp.eq.s32.totalorder %s12, 0
      %p51 = por %p49, %p50
      %p52 = scmp.ne.s32.totalorder %s41, %s44
      %p53 = scmp.eq.s32.totalorder %s17, 3
      %p54 = por %p52, %p53
      %p55 = scmp.ne.s32.totalorder %s44, %s45
      %p56 = scmp.eq.s32.totalorder %s17, 0
      %p57 = por %p55, %p56
      %p58 = scmp.ne.s32.totalorder %s44, %s45
      %p59 = scmp.eq.s32.totalorder %s18, 3
      %p60 = por %p58, %p59
      %p62 = scmp.ne.s32.totalorder %s45, %s61
      %p63 = scmp.eq.s32.totalorder %s18, 0
      %p64 = por %p62, %p63
      %s65 = ssub.s32 %s19, %s38
      %p66 = scmp.eq.s32.totalorder %s65, 0
      %s68 = sadd.s32 %s67, 1
      %s69 = scalar_select %p66, %s67, %s68
      %p72 = pneg %p66
      %p73 = scmp.eq.s32.totalorder %s12, 3
      %p74 = por %p72, %p73
      %p75 = scmp.ne.s32.totalorder %s67, %s70
      %p76 = scmp.eq.s32.totalorder %s12, 0
      %p77 = por %p75, %p76
      %p78 = scmp.ne.s32.totalorder %s67, %s70
      %p79 = scmp.eq.s32.totalorder %s17, 3
      %p80 = por %p78, %p79
      %p81 = scmp.ne.s32.totalorder %s70, %s71
      %p82 = scmp.eq.s32.totalorder %s17, 0
      %p83 = por %p81, %p82
      %p84 = scmp.ne.s32.totalorder %s70, %s71
      %p85 = scmp.eq.s32.totalorder %s18, 3
      %p86 = por %p84, %p85
      %p88 = scmp.ne.s32.totalorder %s71, %s87
      %p89 = scmp.eq.s32.totalorder %s18, 0
      %p90 = por %p88, %p89
      %s91 = ssub.s32 %s19, %s38
      %p92 = scmp.eq.s32.totalorder %s91, 0
      %s94 = sadd.s32 %s93, 1
      %s95 = scalar_select %p92, %s93, %s94
      %p98 = pneg %p92
      %p99 = scmp.eq.s32.totalorder %s12, 3
      %p100 = por %p98, %p99
      %p101 = scmp.ne.s32.totalorder %s93, %s96
      %p102 = scmp.eq.s32.totalorder %s12, 0
      %p103 = por %p101, %p102
      %p104 = scmp.ne.s32.totalorder %s93, %s96
      %p105 = scmp.eq.s32.totalorder %s17, 3
      %p106 = por %p104, %p105
      %p107 = scmp.ne.s32.totalorder %s96, %s97
      %p108 = scmp.eq.s32.totalorder %s17, 0
      %p109 = por %p107, %p108
      %p110 = scmp.ne.s32.totalorder %s96, %s97
      %p111 = scmp.eq.s32.totalorder %s18, 3
      %p112 = por %p110, %p111
      %p114 = scmp.ne.s32.totalorder %s97, %s113
      %p115 = scmp.eq.s32.totalorder %s18, 0
      %p116 = por %p114, %p115
      %s117 = ssub.s32 %s19, %s38
      %p118 = scmp.eq.s32.totalorder %s117, 0
      %s120 = sadd.s32 %s119, 1
      %s121 = scalar_select %p118, %s119, %s120
      %p124 = pneg %p118
      %p125 = scmp.eq.s32.totalorder %s12, 3
      %p126 = por %p124, %p125
      %p127 = scmp.ne.s32.totalorder %s119, %s122
      %p128 = scmp.eq.s32.totalorder %s12, 0
      %p129 = por %p127, %p128
      %p130 = scmp.ne.s32.totalorder %s119, %s122
      %p131 = scmp.eq.s32.totalorder %s17, 3
      %p132 = por %p130, %p131
      %p133 = scmp.ne.s32.totalorder %s122, %s123
      %p134 = scmp.eq.s32.totalorder %s17, 0
      %p135 = por %p133, %p134
      %p136 = scmp.ne.s32.totalorder %s122, %s123
      %p137 = scmp.eq.s32.totalorder %s18, 3
      %p138 = por %p136, %p137
      %p140 = scmp.ne.s32.totalorder %s123, %s139
      %p141 = scmp.eq.s32.totalorder %s18, 0
      %p142 = por %p140, %p141
      %s143 = ssub.s32 %s21, %s30
      %p144 = scmp.eq.s32.totalorder %s143, 0
      %s146 = sadd.s32 %s145, 1
      %s147 = scalar_select %p144, %s145, %s146
      %p150 = pneg %p144
      %p151 = scmp.eq.s32.totalorder %s12, 3
      %p152 = por %p150, %p151
      %p153 = scmp.ne.s32.totalorder %s145, %s148
      %p154 = scmp.eq.s32.totalorder %s12, 0
      %p155 = por %p153, %p154
      %p156 = scmp.ne.s32.totalorder %s145, %s148
      %p157 = scmp.eq.s32.totalorder %s17, 3
      %p158 = por %p156, %p157
      %p159 = scmp.ne.s32.totalorder %s148, %s149
      %p160 = scmp.eq.s32.totalorder %s17, 0
      %p161 = por %p159, %p160
      %p162 = scmp.ne.s32.totalorder %s148, %s149
      %p163 = scmp.eq.s32.totalorder %s18, 3
      %p164 = por %p162, %p163
      %p166 = scmp.ne.s32.totalorder %s149, %s165
      %p167 = scmp.eq.s32.totalorder %s18, 0
      %p168 = por %p166, %p167
      %s169 = ssub.s32 %s21, %s30
      %p170 = scmp.eq.s32.totalorder %s169, 0
      %s172 = sadd.s32 %s171, 1
      %s173 = scalar_select %p170, %s171, %s172
      %p176 = pneg %p170
      %p177 = scmp.eq.s32.totalorder %s12, 3
      %p178 = por %p176, %p177
      %p179 = scmp.ne.s32.totalorder %s171, %s174
      %p180 = scmp.eq.s32.totalorder %s12, 0
      %p181 = por %p179, %p180
      %p182 = scmp.ne.s32.totalorder %s171, %s174
      %p183 = scmp.eq.s32.totalorder %s17, 3
      %p184 = por %p182, %p183
      %p185 = scmp.ne.s32.totalorder %s174, %s175
      %p186 = scmp.eq.s32.totalorder %s17, 0
      %p187 = por %p185, %p186
      %p188 = scmp.ne.s32.totalorder %s174, %s175
      %p189 = scmp.eq.s32.totalorder %s18, 3
      %p190 = por %p188, %p189
      %p192 = scmp.ne.s32.totalorder %s175, %s191
      %p193 = scmp.eq.s32.totalorder %s18, 0
      %p194 = por %p192, %p193
      %s195 = ssub.s32 %s19, %s38
      %p196 = scmp.eq.s32.totalorder %s195, 0
      %s198 = sadd.s32 %s197, 1
      %s199 = scalar_select %p196, %s197, %s198
      %p202 = pneg %p196
      %p203 = scmp.eq.s32.totalorder %s12, 3
      %p204 = por %p202, %p203
      %p205 = scmp.ne.s32.totalorder %s197, %s200
      %p206 = scmp.eq.s32.totalorder %s12, 0
      %p207 = por %p205, %p206
      %p208 = scmp.ne.s32.totalorder %s197, %s200
      %p209 = scmp.eq.s32.totalorder %s17, 3
      %p210 = por %p208, %p209
      %p211 = scmp.ne.s32.totalorder %s200, %s201
      %p212 = scmp.eq.s32.totalorder %s17, 0
      %p213 = por %p211, %p212
      %p214 = scmp.ne.s32.totalorder %s200, %s201
      %p215 = scmp.eq.s32.totalorder %s18, 3
      %p216 = por %p214, %p215
      %p218 = scmp.ne.s32.totalorder %s201, %s217
      %p219 = scmp.eq.s32.totalorder %s18, 0
      %p220 = por %p218, %p219
      %p221 = scmp.le.s32.totalorder 1, %s12
      %p222 = scmp.lt.s32.totalorder %s12, 5
      %p223 = pnand %p221, %p222
      %p224 = pneg %p223
      // Predicated region
      $region9: #{forward.3} parent=5 // pred_check
        _
      $region10: #{forward.3} parent=5 // pred_check_branch
        %226 = sbr.rel (%p223) target = $region12
      $region11: #{forward.3} parent=5 // pred_region
        %s227 = ssub.s32 %s12, 1
        // Predicated region
        $region13: #{forward.3} parent=11 // pred_check
          %p228 = pneg %p57
        $region14: #{forward.3} parent=11 // pred_check_branch
          %230 = sbr.rel (%p228) target = $region16
        $region15: #{forward.3} parent=11 // pred_region
          %s231 = smul.u32 2, %s22
          %p232 = scmp.lt.s32.totalorder %s231, 1
          %s233 = scalar_select %p232, %s231, 1
          %s234 = smul.addr %s233, 8
          %s235 = scalar_lea.vmem %s0, %s234
          %s236 = smul.u32 2, %s22
        $region16: #{forward.3} parent=11 // pred_fallthru
          _
        // Predicated region
        $region17: #{forward.3} parent=11 // pred_check
          %p237 = pneg %p83
        $region18: #{forward.3} parent=11 // pred_check_branch
          %239 = sbr.rel (%p237) target = $region20
        $region19: #{forward.3} parent=11 // pred_region
          %s240 = smul.u32 2, %s22
          %p241 = scmp.lt.s32.totalorder %s240, 1
          %s242 = scalar_select %p241, %s240, 1
          %s243 = smul.addr %s242, 8
          %s244 = scalar_lea.vmem %s1, %s243
          %s245 = smul.u32 2, %s22
        $region20: #{forward.3} parent=11 // pred_fallthru
          _
        // Predicated region
        $region21: #{forward.3} parent=11 // pred_check
          %p246 = pneg %p109
        $region22: #{forward.3} parent=11 // pred_check_branch
          %248 = sbr.rel (%p246) target = $region24
        $region23: #{forward.3} parent=11 // pred_region
          %s249 = smul.u32 2, %s22
          %p250 = scmp.lt.s32.totalorder %s249, 1
          %s251 = scalar_select %p250, %s249, 1
          %s252 = smul.addr %s251, 8
          %s253 = scalar_lea.vmem %s2, %s252
          %s254 = smul.u32 2, %s22
        $region24: #{forward.3} parent=11 // pred_fallthru
          _
        // Predicated region
        $region25: #{forward.3} parent=11 // pred_check
          %p255 = pneg %p135
        $region26: #{forward.3} parent=11 // pred_check_branch
          %257 = sbr.rel (%p255) target = $region28
        $region27: #{forward.3} parent=11 // pred_region
          %s258 = smul.u32 2, %s22
          %p259 = scmp.lt.s32.totalorder %s258, 1
          %s260 = scalar_select %p259, %s258, 1
          %s261 = smul.addr %s260, 8
          %s262 = scalar_lea.vmem %s3, %s261
          %s263 = smul.u32 2, %s22
        $region28: #{forward.3} parent=11 // pred_fallthru
          _
      $region12: #{forward.3} parent=5 // pred_fallthru
        _
      %p264 = scmp.lt.s32.totalorder %s12, 4
      // Predicated region
      $region29: #{forward.3} parent=5 // pred_check
        %p265 = pneg %p264
      $region30: #{forward.3} parent=5 // pred_check_branch
        %267 = sbr.rel (%p265) target = $region32
      $region31: #{forward.3} parent=5 // pred_region
        // Predicated region
        $region33: #{forward.3} parent=31 // pred_check
          %p268 = pneg %p155
        $region34: #{forward.3} parent=31 // pred_check_branch
          %270 = sbr.rel (%p268) target = $region36
        $region35: #{forward.3} parent=31 // pred_region
          %s271 = sand.u32 %s145, 1
          %s272 = sand.u32 %s145, 1
          %s273 = smul.addr %s272, 64
          %s274 = scalar_lea.vmem [#allocation6], %s273
          %s275 = smul.addr %s21, 4
          %s276 = scalar_lea.vmem %s4, %s275
          // Predicated region
          $region37: #{forward.3} parent=35 // pred_check
            _
          $region38: #{forward.3} parent=35 // pred_check_branch
            %278 = sbr.rel (0) target = $region40
          $region39: #{forward.3} parent=35 // pred_region
            // Predicated region
            $region41: #{forward.3} parent=39 // pred_check
              _
            $region42: #{forward.3} parent=39 // pred_check_branch
              %280 = sbr.rel target = $region44
            $region43: #{forward.3} parent=39 // pred_region
              // Predicated region
              $region56: #{forward.3} parent=43 // pred_check
                _
              $region57: #{forward.3} parent=43 // pred_check_branch
                %326 = sbr.rel (0) target = $region59
              $region58: #{forward.3} parent=43 // pred_region
                loop: start=0, step=1, limit=1
                $region60: #{forward.3} parent=58 // loop_pre_header
                  _
                $region61: #{forward.3} parent=58 // loop_header
                  %s328 = sphi 0, %s332
                  %p329 = scmp.ge.s32.totalorder %s328, 1
                  %s333 = sphi %s276, %s276
                  %s334 = sphi %s274, %s274
                $region62: #{forward.3} parent=58 // loop_header_branch
                  %331 = sbr.rel (%p329) target = $region66
                $region63: #{forward.3} parent=58 // loop_body
                  _
                $region64: #{forward.3} parent=58 // loop_footer
                  %s332 = sadd.s32 1, %s328
                $region65: #{forward.3} parent=58 // loop_footer_branch
                  %327 = sbr.rel target = $region61
                $region66: #{forward.3} parent=58 // loop_exit
                  _
                %s336 = ssub.s32 16, 1
                loop: start=0, step=1, limit=1
                $region67: #{forward.3} parent=58 // loop_pre_header
                  _
                $region68: #{forward.3} parent=58 // loop_header
                  %s338 = sphi 0, %s342
                  %p339 = scmp.ge.s32.totalorder %s338, 1
                  %s343 = sphi %s276, %s276
                  %s344 = sphi %s274, %s274
                $region69: #{forward.3} parent=58 // loop_header_branch
                  %341 = sbr.rel (%p339) target = $region73
                $region70: #{forward.3} parent=58 // loop_body
                  %v345 = vld [vmem:[%s343] sm:%s336]
                  %346 = vst [vmem:[%s344] sm:%s336] %v345
                  %v347 = vld [vmem:[%s343 + $0x8] sm:%s336]
                  %348 = vst [vmem:[%s344 + $0x4] sm:%s336] %v347
                  %v349 = vld [vmem:[%s343 + $0x10] sm:%s336]
                  %350 = vst [vmem:[%s344 + $0x8] sm:%s336] %v349
                  %v351 = vld [vmem:[%s343 + $0x18] sm:%s336]
                  %352 = vst [vmem:[%s344 + $0xc] sm:%s336] %v351
                  %v353 = vld [vmem:[%s343 + $0x20] sm:%s336]
                  %354 = vst [vmem:[%s344 + $0x10] sm:%s336] %v353
                  %v355 = vld [vmem:[%s343 + $0x28] sm:%s336]
                  %356 = vst [vmem:[%s344 + $0x14] sm:%s336] %v355
                  %v357 = vld [vmem:[%s343 + $0x30] sm:%s336]
                  %358 = vst [vmem:[%s344 + $0x18] sm:%s336] %v357
                  %v359 = vld [vmem:[%s343 + $0x38] sm:%s336]
                  %360 = vst [vmem:[%s344 + $0x1c] sm:%s336] %v359
                  %v361 = vld [vmem:[%s343 + $0x40] sm:%s336]
                  %362 = vst [vmem:[%s344 + $0x20] sm:%s336] %v361
                  %v363 = vld [vmem:[%s343 + $0x48] sm:%s336]
                  %364 = vst [vmem:[%s344 + $0x24] sm:%s336] %v363
                  %v365 = vld [vmem:[%s343 + $0x50] sm:%s336]
                  %366 = vst [vmem:[%s344 + $0x28] sm:%s336] %v365
                  %v367 = vld [vmem:[%s343 + $0x58] sm:%s336]
                  %368 = vst [vmem:[%s344 + $0x2c] sm:%s336] %v367
                  %v369 = vld [vmem:[%s343 + $0x60] sm:%s336]
                  %370 = vst [vmem:[%s344 + $0x30] sm:%s336] %v369
                  %v371 = vld [vmem:[%s343 + $0x68] sm:%s336]
                  %372 = vst [vmem:[%s344 + $0x34] sm:%s336] %v371
                  %v373 = vld [vmem:[%s343 + $0x70] sm:%s336]
                  %374 = vst [vmem:[%s344 + $0x38] sm:%s336] %v373
                  %v375 = vld [vmem:[%s343 + $0x78] sm:%s336]
                  %376 = vst [vmem:[%s344 + $0x3c] sm:%s336] %v375
                $region71: #{forward.3} parent=58 // loop_footer
                  %s342 = sadd.s32 1, %s338
                $region72: #{forward.3} parent=58 // loop_footer_branch
                  %337 = sbr.rel target = $region68
                $region73: #{forward.3} parent=58 // loop_exit
                  _
              $region59: #{forward.3} parent=43 // pred_fallthru
                _
            $region44: #{forward.3} parent=39 // pred_fallthru
              _
            // Predicated region
            $region45: #{forward.3} parent=39 // pred_check
              _
            $region46: #{forward.3} parent=39 // pred_check_branch
              %282 = sbr.rel (0) target = $region48
            $region47: #{forward.3} parent=39 // pred_region
              %s284 = ssub.s32 16, 1
              loop: start=0, step=1, limit=1
              $region49: #{forward.3} parent=47 // loop_pre_header
                _
              $region50: #{forward.3} parent=47 // loop_header
                %s286 = sphi 0, %s290
                %p287 = scmp.ge.s32.totalorder %s286, 1
                %s291 = sphi %s276, %s276
                %s292 = sphi %s274, %s274
              $region51: #{forward.3} parent=47 // loop_header_branch
                %289 = sbr.rel (%p287) target = $region55
              $region52: #{forward.3} parent=47 // loop_body
                %v293 = vld [vmem:[%s291] sm:%s284]
                %294 = vst [vmem:[%s292] sm:%s284] %v293
                %v295 = vld [vmem:[%s291 + $0x8] sm:%s284]
                %296 = vst [vmem:[%s292 + $0x4] sm:%s284] %v295
                %v297 = vld [vmem:[%s291 + $0x10] sm:%s284]
                %298 = vst [vmem:[%s292 + $0x8] sm:%s284] %v297
                %v299 = vld [vmem:[%s291 + $0x18] sm:%s284]
                %300 = vst [vmem:[%s292 + $0xc] sm:%s284] %v299
                %v301 = vld [vmem:[%s291 + $0x20] sm:%s284]
                %302 = vst [vmem:[%s292 + $0x10] sm:%s284] %v301
                %v303 = vld [vmem:[%s291 + $0x28] sm:%s284]
                %304 = vst [vmem:[%s292 + $0x14] sm:%s284] %v303
                %v305 = vld [vmem:[%s291 + $0x30] sm:%s284]
                %306 = vst [vmem:[%s292 + $0x18] sm:%s284] %v305
                %v307 = vld [vmem:[%s291 + $0x38] sm:%s284]
                %308 = vst [vmem:[%s292 + $0x1c] sm:%s284] %v307
                %v309 = vld [vmem:[%s291 + $0x40] sm:%s284]
                %310 = vst [vmem:[%s292 + $0x20] sm:%s284] %v309
                %v311 = vld [vmem:[%s291 + $0x48] sm:%s284]
                %312 = vst [vmem:[%s292 + $0x24] sm:%s284] %v311
                %v313 = vld [vmem:[%s291 + $0x50] sm:%s284]
                %314 = vst [vmem:[%s292 + $0x28] sm:%s284] %v313
                %v315 = vld [vmem:[%s291 + $0x58] sm:%s284]
                %316 = vst [vmem:[%s292 + $0x2c] sm:%s284] %v315
                %v317 = vld [vmem:[%s291 + $0x60] sm:%s284]
                %318 = vst [vmem:[%s292 + $0x30] sm:%s284] %v317
                %v319 = vld [vmem:[%s291 + $0x68] sm:%s284]
                %320 = vst [vmem:[%s292 + $0x34] sm:%s284] %v319
                %v321 = vld [vmem:[%s291 + $0x70] sm:%s284]
                %322 = vst [vmem:[%s292 + $0x38] sm:%s284] %v321
                %v323 = vld [vmem:[%s291 + $0x78] sm:%s284]
                %324 = vst [vmem:[%s292 + $0x3c] sm:%s284] %v323
              $region53: #{forward.3} parent=47 // loop_footer
                %s290 = sadd.s32 1, %s286
              $region54: #{forward.3} parent=47 // loop_footer_branch
                %285 = sbr.rel target = $region50
              $region55: #{forward.3} parent=47 // loop_exit
                _
            $region48: #{forward.3} parent=39 // pred_fallthru
              _
          $region40: #{forward.3} parent=35 // pred_fallthru
            _
          %377 = vnop
        $region36: #{forward.3} parent=31 // pred_fallthru
          _
        // Predicated region
        $region74: #{forward.3} parent=31 // pred_check
          %p378 = pneg %p181
        $region75: #{forward.3} parent=31 // pred_check_branch
          %380 = sbr.rel (%p378) target = $region77
        $region76: #{forward.3} parent=31 // pred_region
          %p381 = scmp.lt.s32.totalorder %s21, 1
          %s382 = scalar_select %p381, %s21, 1
          %s383 = scalar_lea.vmem %s5, %s382
        $region77: #{forward.3} parent=31 // pred_fallthru
          _
      $region32: #{forward.3} parent=5 // pred_fallthru
        _
      %p384 = scmp.le.s32.totalorder 1, %s12
      %p385 = scmp.lt.s32.totalorder %s12, 5
      %p386 = pnand %p384, %p385
      %p387 = pneg %p386
      // Predicated region
      $region78: #{forward.3} parent=5 // pred_check
        _
      $region79: #{forward.3} parent=5 // pred_check_branch
        %389 = sbr.rel (%p386) target = $region81
      $region80: #{forward.3} parent=5 // pred_region
        %s390 = ssub.s32 %s12, 1
        %s391 = sand.u32 %s148, 1
        %s392 = sand.u32 %s148, 1
        %s393 = smul.addr %s392, 64
        %s394 = scalar_lea.vmem [#allocation6], %s393
        // Predicated region
        $region82: #{forward.3} parent=80 // pred_check
          %p395 = pneg %p161
        $region83: #{forward.3} parent=80 // pred_check_branch
          %397 = sbr.rel (%p395) target = $region85
        $region84: #{forward.3} parent=80 // pred_region
          _
        $region85: #{forward.3} parent=80 // pred_fallthru
          _
        %s398 = smul.u32 2, %s22
        %p399 = scmp.lt.s32.totalorder %s398, 1
        %s400 = scalar_select %p399, %s398, 1
        %s401 = smul.addr %s400, 8
        %s402 = scalar_lea.vmem %s0, %s401
        %p403 = pneg %p57
        %p404 = pneg %p54
        %s405 = smul.u32 2, %s22
        %p406 = scmp.lt.s32.totalorder %s405, 1
        %s407 = scalar_select %p406, %s405, 1
        %s408 = smul.addr %s407, 8
        %s409 = scalar_lea.vmem %s1, %s408
        %p410 = pneg %p83
        %p411 = pneg %p80
        %s412 = smul.u32 2, %s22
        %p413 = scmp.lt.s32.totalorder %s412, 1
        %s414 = scalar_select %p413, %s412, 1
        %s415 = smul.addr %s414, 8
        %s416 = scalar_lea.vmem %s2, %s415
        %p417 = pneg %p109
        %p418 = pneg %p106
        %s419 = smul.u32 2, %s22
        %p420 = scmp.lt.s32.totalorder %s419, 1
        %s421 = scalar_select %p420, %s419, 1
        %s422 = smul.addr %s421, 8
        %s423 = scalar_lea.vmem %s3, %s422
        %p424 = pneg %p135
        %p425 = pneg %p132
        %s426 = sand.u32 %s148, 1
        %s427 = sand.u32 %s148, 1
        %s428 = smul.addr %s427, 64
        %s429 = scalar_lea.vmem [#allocation6], %s428
        %p430 = pneg %p161
        %p431 = pneg %p158
        %p432 = scmp.lt.s32.totalorder %s24, 1
        %s433 = scalar_select %p432, %s24, 1
        %s434 = scalar_lea.vmem %s5, %s433
        %p435 = pneg %p187
        %p436 = pneg %p184
        %p437 = pneg %p213
        %p438 = pneg %p210
        %s439 = smul.u32 2, %s22
        %p440 = scmp.lt.s32.totalorder %s439, 1
        %s441 = scalar_select %p440, %s439, 1
        %s442 = smul.addr %s441, 8
        %s443 = scalar_lea.vmem %s6, %s442
        %s444 = smul.u32 2, %s22
        %p445 = scmp.lt.s32.totalorder %s444, 1
        %s446 = scalar_select %p445, %s444, 1
        %s447 = smul.addr %s446, 8
        %s448 = scalar_lea.vmem %s0, %s447
        %s449 = smul.u32 2, %s22
        %s450 = smul.u32 2, %s22
        %p451 = scmp.lt.s32.totalorder %s450, 1
        %s452 = scalar_select %p451, %s450, 1
        %s453 = smul.addr %s452, 8
        %s454 = scalar_lea.vmem %s1, %s453
        %s455 = smul.u32 2, %s22
        %s456 = smul.u32 2, %s22
        %p457 = scmp.lt.s32.totalorder %s456, 1
        %s458 = scalar_select %p457, %s456, 1
        %s459 = smul.addr %s458, 8
        %s460 = scalar_lea.vmem %s2, %s459
        %s461 = smul.u32 2, %s22
        %s462 = smul.u32 2, %s22
        %p463 = scmp.lt.s32.totalorder %s462, 1
        %s464 = scalar_select %p463, %s462, 1
        %s465 = smul.addr %s464, 8
        %s466 = scalar_lea.vmem %s3, %s465
        %s467 = smul.u32 2, %s22
        %p468 = scmp.lt.s32.totalorder %s24, 1
        %s469 = scalar_select %p468, %s24, 1
        %s470 = scalar_lea.vmem %s5, %s469
        %s471 = smul.u32 2, %s22
        %p472 = scmp.lt.s32.totalorder %s471, 1
        %s473 = scalar_select %p472, %s471, 1
        %s474 = smul.addr %s473, 8
        %s475 = scalar_lea.vmem %s6, %s474
        %s476 = smul.u32 2, %s22
        %v478 = vld [vmem:[%s466] sm:$0xff]
        %v479 = vld [vmem:[%s466 + $0x8] sm:$0xff]
        %v480 = vmul.f32 %v478, %v478
        %v481 = vmul.f32 %v479, %v479
        %482 = vadd.xlane.f32.xlu0 %v480
        %v483 = vpop.xlane.xlu0 %482
        %484 = vadd.xlane.f32.xlu0 %v481
        %v485 = vpop.xlane.xlu0 %484
        %v486 = vld [vmem:[%s448] sm:$0xff]
        %v487 = vld [vmem:[%s448 + $0x8] sm:$0xff]
        %v488 = vadd.f32 %v486, 3.0
        %v489 = vadd.f32 %v487, 3.0
        %v490 = vsub.f32 %v488, %v483
        %v491 = vsub.f32 %v489, %v485
        %v492 = vpack.c.bf16 %v479, %v478
        %v493 = vld [vmem:[%s394] sm:$0xf]
        %v494 = vld [vmem:[%s394 + $0x4] sm:$0xf]
        %v495 = vld [vmem:[%s394 + $0x8] sm:$0xf]
        %v496 = vld [vmem:[%s394 + $0xc] sm:$0xf]
        %v497 = vld [vmem:[%s394 + $0x10] sm:$0xf]
        %v498 = vld [vmem:[%s394 + $0x14] sm:$0xf]
        %v499 = vld [vmem:[%s394 + $0x18] sm:$0xf]
        %v500 = vld [vmem:[%s394 + $0x1c] sm:$0xf]
        %v501 = vld [vmem:[%s394 + $0x20] sm:$0xf]
        %v502 = vld [vmem:[%s394 + $0x24] sm:$0xf]
        %v503 = vld [vmem:[%s394 + $0x28] sm:$0xf]
        %v504 = vld [vmem:[%s394 + $0x2c] sm:$0xf]
        %v505 = vld [vmem:[%s394 + $0x30] sm:$0xf]
        %v506 = vld [vmem:[%s394 + $0x34] sm:$0xf]
        %v507 = vld [vmem:[%s394 + $0x38] sm:$0xf]
        %v508 = vld [vmem:[%s394 + $0x3c] sm:$0xf]
        %v525 = vunpack.c.l.b16 %v493
        %v526 = vunpack.c.l.b16 %v494
        %v527 = vunpack.c.l.b16 %v495
        %v528 = vunpack.c.l.b16 %v496
        %v529 = vunpack.c.l.b16 %v497
        %v530 = vunpack.c.l.b16 %v498
        %v531 = vunpack.c.l.b16 %v499
        %v532 = vunpack.c.l.b16 %v500
        %v533 = vunpack.c.l.b16 %v501
        %v534 = vunpack.c.l.b16 %v502
        %v535 = vunpack.c.l.b16 %v503
        %v536 = vunpack.c.l.b16 %v504
        %v537 = vunpack.c.l.b16 %v505
        %v538 = vunpack.c.l.b16 %v506
        %v539 = vunpack.c.l.b16 %v507
        %v540 = vunpack.c.l.b16 %v508
        %v541 = vpack.c.b16 %v526, %v525
        %v542 = vpack.c.b16 %v528, %v527
        %v543 = vpack.c.b16 %v530, %v529
        %v544 = vpack.c.b16 %v532, %v531
        %v545 = vpack.c.b16 %v534, %v533
        %v546 = vpack.c.b16 %v536, %v535
        %v547 = vpack.c.b16 %v538, %v537
        %v548 = vpack.c.b16 %v540, %v539
        %557 = vmatprep.subr.bf16.mxu0 0
        %558 = vmatpush1.bf16.msra.mxu0 %v548
        %559 = vmatprep.subr.bf16.mxu0 0
        %560 = vmatpush1.bf16.msra.mxu0 %v547
        %561 = vmatprep.subr.bf16.mxu0 0
        %562 = vmatpush1.bf16.msra.mxu0 %v546
        %563 = vmatprep.subr.bf16.mxu0 0
        %564 = vmatpush1.bf16.msra.mxu0 %v545
        %565 = vmatprep.subr.bf16.mxu0 0
        %566 = vmatpush1.bf16.msra.mxu0 %v544
        %567 = vmatprep.subr.bf16.mxu0 0
        %568 = vmatpush1.bf16.msra.mxu0 %v543
        %569 = vmatprep.subr.bf16.mxu0 0
        %570 = vmatpush1.bf16.msra.mxu0 %v542
        %571 = vmatprep.subr.bf16.mxu0 0
        %572 = vmatpush1.bf16.msra.mxu0 %v541
        %573 = vmatprep.subr.bf16.mxu0 0
        %574 = vmatpush2.bf16.msra.mxu0 0
        %575 = vmatprep.subr.bf16.mxu0 0
        %576 = vmatpush2.bf16.msra.mxu0 0
        %577 = vmatprep.subr.bf16.mxu0 0
        %578 = vmatpush2.bf16.msra.mxu0 0
        %579 = vmatprep.subr.bf16.mxu0 0
        %580 = vmatpush2.bf16.msra.mxu0 0
        %581 = vmatprep.subr.bf16.mxu0 0
        %582 = vmatpush2.bf16.msra.mxu0 0
        %583 = vmatprep.subr.bf16.mxu0 0
        %584 = vmatpush2.bf16.msra.mxu0 0
        %585 = vmatprep.subr.bf16.mxu0 0
        %586 = vmatpush2.bf16.msra.mxu0 0
        %587 = vmatprep.subr.bf16.mxu0 0
        %588 = vmatpush2.bf16.msra.mxu0 0
        %589 = vmatprep.mubr.bf16.mxu0 0
        %590 = vmatmul.mubr.bf16.gmra.mxu0 %v492
        %v591 = vpop.f32.mrf.mxu0
        %v592 = vadd.f32 0.0, %v591
        %v593 = vpop.f32.mrf.mxu0
        %v594 = vpop.f32.mrf.mxu0
        %v595 = vadd.f32 0.0, %v594
        %v596 = vpop.f32.mrf.mxu0
        %597 = vdwg.mxu0
        %s598 = smul.u32 %s24, 128
        %v599 = vlaneseq
        %v600 = vand.u32 %v599, 127
        %v601 = vstv %s598
        %v602 = vadd.s32 %v601, %v600
        %v603 = vld [vmem:[%s454] sm:$0xff]
        %v604 = vld [vmem:[%s454 + $0x8] sm:$0xff]
        %605 = vset.pattern.permute.xlu0 0
        %606 = vperm.xlu0 %605, %v603
        %v607 = vpop.permute.xlu0 %606
        %608 = vset.pattern.permute.xlu0 0
        %609 = vperm.xlu0 %608, %v604
        %v610 = vpop.permute.xlu0 %609
        %vm611 = vcmp.eq.s32.totalorder %v602, %v607
        %vm612 = vcmp.eq.s32.totalorder %v602, %v610
        %v613 = vsel %vm611, 1, 0
        %v614 = vsel %vm612, 1, 0
        %v615 = vcvt.s32.f32 %v613
        %v616 = vcvt.s32.f32 %v614
        %v617 = vsub.f32 1.0, %v615
        %v618 = vsub.f32 1.0, %v616
        %v619 = vld [vmem:[%s460] sm:$0xff]
        %v620 = vld [vmem:[%s460 + $0x8] sm:$0xff]
        %621 = vset.pattern.permute.xlu0 0
        %622 = vperm.xlu0 %621, %v619
        %v623 = vpop.permute.xlu0 %622
        %624 = vset.pattern.permute.xlu0 0
        %625 = vperm.xlu0 %624, %v620
        %v626 = vpop.permute.xlu0 %625
        %vm627 = vcmp.eq.s32.totalorder %v602, %v623
        %vm628 = vcmp.eq.s32.totalorder %v602, %v626
        %v629 = vsel %vm627, 1, 0
        %v630 = vsel %vm628, 1, 0
        %v631 = vcvt.s32.f32 %v629
        %v632 = vcvt.s32.f32 %v630
        %v633 = vsub.f32 %v617, %v631
        %v634 = vsub.f32 %v618, %v632
        %v635 = vld [vmem:[%s470] sm:$0x1]
        %637 = vset.pattern.permute.xlu0 0
        %638 = vperm.xlu0 %637, %v490
        %v639 = vpop.permute.xlu0 %638
        %642 = vset.pattern.permute.xlu0 0
        %643 = vperm.xlu0 %642, %v491
        %v644 = vpop.permute.xlu0 %643
        %v647 = vlaneseq
        %v648 = vshrl.u32 %v647, 7
        %v649 = vsub.s32 0, %v648
        %v650 = vrot.slane %v635, %v649
        %v652 = vsub.f32 %v639, %v650
        %v653 = vsub.f32 %v644, %v650
        %v654 = vmul.f32 %v592, 2.0
        %v655 = vmul.f32 %v595, 2.0
        %v656 = vadd.f32 %v652, %v654
        %v657 = vadd.f32 %v653, %v655
        %v658 = vmul.f32 %v656, %v633
        %v659 = vmul.f32 %v657, %v634
        %p660 = scmp.eq.s32.totalorder %s23, 0
        // Predicated region
        $region86: #{forward.3} parent=80 // pred_check
          %p661 = pneg %p660
        $region87: #{forward.3} parent=80 // pred_check_branch
          %663 = sbr.rel (%p661) target = $region89
        $region88: #{forward.3} parent=80 // pred_region
          %p664 = scmp.eq.s32.totalorder %s24, 0
          // Predicated region
          $region90: #{forward.3} parent=88 // pred_check
            %p665 = pneg %p664
          $region91: #{forward.3} parent=88 // pred_check_branch
            %667 = sbr.rel (%p665) target = $region93
          $region92: #{forward.3} parent=88 // pred_region
            %vm668 = vcmask 7168
            %669 = vst.msk [vmem:[#allocation2] sm:$0xff] %vm668, 0.0
            %670 = vst.msk [vmem:[#allocation2 + $0x8] sm:$0xff] %vm668, 0.0
            %671 = vst.msk [vmem:[#allocation3] sm:$0xff] %vm668, 0.0
            %672 = vst.msk [vmem:[#allocation3 + $0x8] sm:$0xff] %vm668, 0.0
          $region93: #{forward.3} parent=88 // pred_fallthru
            _
          %v673 = vld [vmem:[#allocation2] sm:$0xff]
          %v674 = vld [vmem:[#allocation2 + $0x8] sm:$0xff]
          %675 = vadd.xlane.f32.xlu0 %v658
          %v676 = vpop.xlane.xlu0 %675
          %677 = vadd.xlane.f32.xlu0 %v659
          %v678 = vpop.xlane.xlu0 %677
          %v679 = vadd.f32 %v673, %v676
          %v680 = vadd.f32 %v674, %v678
          %vm681 = vcmask 7168
          %682 = vst.msk [vmem:[#allocation2] sm:$0xff] %vm681, %v679
          %683 = vst.msk [vmem:[#allocation2 + $0x8] sm:$0xff] %vm681, %v680
          %v684 = vld [vmem:[#allocation3] sm:$0xff]
          %v685 = vld [vmem:[#allocation3 + $0x8] sm:$0xff]
          %v686 = vmul.f32 %v658, %v658
          %v687 = vmul.f32 %v659, %v659
          %688 = vadd.xlane.f32.xlu0 %v686
          %v689 = vpop.xlane.xlu0 %688
          %690 = vadd.xlane.f32.xlu0 %v687
          %v691 = vpop.xlane.xlu0 %690
          %v692 = vadd.f32 %v684, %v689
          %v693 = vadd.f32 %v685, %v691
          %694 = vst.msk [vmem:[#allocation3] sm:$0xff] %vm681, %v692
          %695 = vst.msk [vmem:[#allocation3 + $0x8] sm:$0xff] %vm681, %v693
          %p696 = scmp.eq.s32.totalorder %s24, 1
          // Predicated region
          $region94: #{forward.3} parent=88 // pred_check
            %p697 = pneg %p696
          $region95: #{forward.3} parent=88 // pred_check_branch
            %699 = sbr.rel (%p697) target = $region97
          $region96: #{forward.3} parent=88 // pred_region
            %v700 = vld [vmem:[#allocation2] sm:$0xff]
            %v701 = vld [vmem:[#allocation2 + $0x8] sm:$0xff]
            %v702 = vmul.f32 %v700, 0.00390625
            %v703 = vmul.f32 %v701, 0.00390625
            %v704 = vld [vmem:[#allocation3] sm:$0xff]
            %v705 = vld [vmem:[#allocation3 + $0x8] sm:$0xff]
            %v706 = vmul.f32 %v704, 0.00390625
            %v707 = vmul.f32 %v705, 0.00390625
            %v708 = vmul.f32 %v702, %v702
            %v709 = vmul.f32 %v703, %v703
            %v710 = vsub.f32 %v706, %v708
            %v711 = vsub.f32 %v707, %v709
            %712 = vst.msk [vmem:[#allocation2] sm:$0xff] %vm681, %v702
            %713 = vst.msk [vmem:[#allocation2 + $0x8] sm:$0xff] %vm681, %v703
            %v714 = vmax.f32 %v710, 1e-12
            %v715 = vmax.f32 %v711, 1e-12
            %v716 = vrsqrt.pop %v714
            %v717 = vrsqrt.pop %v715
            %718 = vst.msk [vmem:[#allocation3] sm:$0xff] %vm681, %v716
            %719 = vst.msk [vmem:[#allocation3 + $0x8] sm:$0xff] %vm681, %v717
          $region97: #{forward.3} parent=88 // pred_fallthru
            _
        $region89: #{forward.3} parent=80 // pred_fallthru
          _
        %p720 = scmp.eq.s32.totalorder %s23, 1
        // Predicated region
        $region98: #{forward.3} parent=80 // pred_check
          %p721 = pneg %p720
        $region99: #{forward.3} parent=80 // pred_check_branch
          %723 = sbr.rel (%p721) target = $region101
        $region100: #{forward.3} parent=80 // pred_region
          %p724 = scmp.eq.s32.totalorder %s24, 0
          // Predicated region
          $region102: #{forward.3} parent=100 // pred_check
            %p725 = pneg %p724
          $region103: #{forward.3} parent=100 // pred_check_branch
            %727 = sbr.rel (%p725) target = $region105
          $region104: #{forward.3} parent=100 // pred_region
            %vm728 = vcmask 7168
            %729 = vst.msk [vmem:[#allocation4] sm:$0xff] %vm728, -inf
            %730 = vst.msk [vmem:[#allocation4 + $0x8] sm:$0xff] %vm728, -inf
            %731 = vst.msk [vmem:[#allocation5] sm:$0xff] %vm728, 0.0
            %732 = vst.msk [vmem:[#allocation5 + $0x8] sm:$0xff] %vm728, 0.0
          $region105: #{forward.3} parent=100 // pred_fallthru
            _
          %v733 = vld [vmem:[#allocation2] sm:$0xff]
          %v734 = vld [vmem:[#allocation2 + $0x8] sm:$0xff]
          %736 = vset.pattern.permute.xlu0 0
          %737 = vperm.xlu0 %736, %v733
          %v738 = vpop.permute.xlu0 %737
          %741 = vset.pattern.permute.xlu0 0
          %742 = vperm.xlu0 %741, %v734
          %v743 = vpop.permute.xlu0 %742
          %v745 = vsub.f32 %v658, %v738
          %v746 = vsub.f32 %v659, %v743
          %v747 = vld [vmem:[#allocation3] sm:$0xff]
          %v748 = vld [vmem:[#allocation3 + $0x8] sm:$0xff]
          %750 = vset.pattern.permute.xlu0 0
          %751 = vperm.xlu0 %750, %v747
          %v752 = vpop.permute.xlu0 %751
          %755 = vset.pattern.permute.xlu0 0
          %756 = vperm.xlu0 %755, %v748
          %v757 = vpop.permute.xlu0 %756
          %v759 = vmul.f32 %v745, %v752
          %v760 = vmul.f32 %v746, %v757
          %v761 = vmul.f32 %v759, 30.0
          %v762 = vmul.f32 %v760, 30.0
          %v763 = vadd.f32 %v761, 10.0
          %v764 = vadd.f32 %v762, 10.0
          %v765 = vld [vmem:[#allocation4] sm:$0xff]
          %v766 = vld [vmem:[#allocation4 + $0x8] sm:$0xff]
          %767 = vmax.xlane.f32.xlu0 %v763
          %v768 = vpop.xlane.xlu0 %767
          %769 = vmax.xlane.f32.xlu0 %v764
          %v770 = vpop.xlane.xlu0 %769
          %v771 = vmax.f32 %v765, %v768
          %v772 = vmax.f32 %v766, %v770
          %v773 = vld [vmem:[#allocation5] sm:$0xff]
          %v774 = vld [vmem:[#allocation5 + $0x8] sm:$0xff]
          %v775 = vsub.f32 %v765, %v771
          %v776 = vsub.f32 %v766, %v772
          %v777 = vmul.f32 %v775, 1.442695
          %v778 = vpow.pop %v777
          %v779 = vmul.f32 %v776, 1.442695
          %v780 = vpow.pop %v779
          %v781 = vmul.f32 %v773, %v778
          %v782 = vmul.f32 %v774, %v780
          %784 = vset.pattern.permute.xlu0 0
          %785 = vperm.xlu0 %784, %v771
          %v786 = vpop.permute.xlu0 %785
          %789 = vset.pattern.permute.xlu0 0
          %790 = vperm.xlu0 %789, %v772
          %v791 = vpop.permute.xlu0 %790
          %v793 = vsub.f32 %v763, %v786
          %v794 = vsub.f32 %v764, %v791
          %v795 = vmul.f32 %v793, 1.442695
          %v796 = vpow.pop %v795
          %v797 = vmul.f32 %v794, 1.442695
          %v798 = vpow.pop %v797
          %799 = vadd.xlane.f32.xlu0 %v796
          %v800 = vpop.xlane.xlu0 %799
          %801 = vadd.xlane.f32.xlu0 %v798
          %v802 = vpop.xlane.xlu0 %801
          %v803 = vadd.f32 %v781, %v800
          %v804 = vadd.f32 %v782, %v802
          %vm805 = vcmask 7168
          %806 = vst.msk [vmem:[#allocation5] sm:$0xff] %vm805, %v803
          %807 = vst.msk [vmem:[#allocation5 + $0x8] sm:$0xff] %vm805, %v804
          %808 = vst.msk [vmem:[#allocation4] sm:$0xff] %vm805, %v771
          %809 = vst.msk [vmem:[#allocation4 + $0x8] sm:$0xff] %vm805, %v772
          %p810 = scmp.eq.s32.totalorder %s24, 1
          // Predicated region
          $region106: #{forward.3} parent=100 // pred_check
            %p811 = pneg %p810
          $region107: #{forward.3} parent=100 // pred_check_branch
            %813 = sbr.rel (%p811) target = $region109
          $region108: #{forward.3} parent=100 // pred_region
            %v814 = vld [vmem:[#allocation4] sm:$0xff]
            %v815 = vld [vmem:[#allocation4 + $0x8] sm:$0xff]
            %v816 = vld [vmem:[#allocation5] sm:$0xff]
            %v817 = vld [vmem:[#allocation5 + $0x8] sm:$0xff]
            %v818 = vlog2.pop %v816
            %v819 = vmul.f32 %v818, 0.6931472
            %v820 = vlog2.pop %v817
            %v821 = vmul.f32 %v820, 0.6931472
            %v822 = vadd.f32 %v814, %v819
            %v823 = vadd.f32 %v815, %v821
            %824 = vst.msk [vmem:[%s475] sm:$0xff] %vm805, %v822
            %825 = vst.msk [vmem:[%s475 + $0x8] sm:$0xff] %vm805, %v823
          $region109: #{forward.3} parent=100 // pred_fallthru
            _
        $region101: #{forward.3} parent=80 // pred_fallthru
          _
        %s826 = smul.u32 2, %s22
        %p827 = scmp.lt.s32.totalorder %s826, 1
        %s828 = scalar_select %p827, %s826, 1
        %s829 = smul.addr %s828, 8
        %s830 = scalar_lea.vmem %s6, %s829
        // Predicated region
        $region110: #{forward.3} parent=80 // pred_check
          %p831 = pneg %p210
        $region111: #{forward.3} parent=80 // pred_check_branch
          %833 = sbr.rel (%p831) target = $region113
        $region112: #{forward.3} parent=80 // pred_region
          %s834 = smul.u32 2, %s22
        $region113: #{forward.3} parent=80 // pred_fallthru
          _
        // Predicated region
        $region114: #{forward.3} parent=80 // pred_check
          %p835 = pneg %p210
        $region115: #{forward.3} parent=80 // pred_check_branch
          %837 = sbr.rel (%p835) target = $region117
        $region116: #{forward.3} parent=80 // pred_region
          %s838 = smul.u32 2, %s22
          %p839 = scmp.lt.s32.totalorder %s838, 1
          %s840 = scalar_select %p839, %s838, 1
          %s841 = smul.addr %s840, 8
          %s842 = scalar_lea.vmem %s6, %s841
        $region117: #{forward.3} parent=80 // pred_fallthru
          _
      $region81: #{forward.3} parent=5 // pred_fallthru
        _
      %p843 = scmp.le.s32.totalorder 2, %s12
      // Predicated region
      $region118: #{forward.3} parent=5 // pred_check
        %p844 = pneg %p843
      $region119: #{forward.3} parent=5 // pred_check_branch
        %846 = sbr.rel (%p844) target = $region121
      $region120: #{forward.3} parent=5 // pred_region
        %s847 = ssub.s32 %s12, 2
      $region121: #{forward.3} parent=5 // pred_fallthru
        _
    $region6: #{forward.3} parent=1 // loop_footer
      %s16 = sadd.s32 1, %s12
    $region7: #{forward.3} parent=1 // loop_footer_branch
      %11 = sbr.rel target = $region3
    $region8: #{forward.3} parent=1 // loop_exit
      _

// kernel: forward.2
$region0: #{forward.2}
  #allocation0 [shape = 'u32[]', space=smem, size = 0x4, offset = 0x4, fixed_abs, tag = 'smem constant byte address 0x4 - core index']
  #allocation1 [shape = 'u32[144,128]{1,0:T(1,128)}', space=vmem, size = 0x12000, scoped, tag = 'internal scratch']
  #allocation2 [shape = 'f32[128,64]{1,0:T(8,128)}', space=vmem, size = 0x10000, scoped, tag = 'scratch operand']
  #allocation3 [shape = 'f32[128,64]{1,0:T(8,128)}', space=vmem, size = 0x10000, scoped, tag = 'scratch operand']
  %s0 = inlined_call_operand.vmem [shape: bf16[256,256], index: 0, kind: input, shape index: {}]
  %s1 = inlined_call_operand.vmem [shape: bf16[256,256], index: 1, kind: input, shape index: {}]
  %s2 = inlined_call_operand.vmem [shape: f32[256,1], index: 2, kind: input, shape index: {}]
  %s3 = inlined_call_operand.vmem [shape: f32[256,1], index: 3, kind: input, shape index: {}]
  %s4 = inlined_call_operand.vmem [shape: bf16[256,64], index: 4, kind: input, shape index: {}]
  %s5 = inlined_call_operand.vmem [shape: bf16[256,64], index: 5, kind: input, shape index: {}]
  %s6 = inlined_call_operand.vmem [shape: f32[256,128], index: 6, kind: output, shape index: {}]
  %s7 = sld [smem:[#allocation0]]
  $region147: #{forward.2} parent=0
    _
  %s9 = ssub.s32 1, %s7
  %s10 = scalar_select 0, %s9, %s7
  $region1: #{forward.2} parent=0
    #allocation4 [shape = 'u8[65536]{0}', space=vmem, size = 0x10000, scoped, tag = 'input window, operand 0']
    #allocation5 [shape = 'u8[65536]{0}', space=vmem, size = 0x10000, scoped, tag = 'input window, operand 1']
    loop: start=0, step=1, limit=6
    $region2: #{forward.2} parent=1 // loop_pre_header
      _
    $region3: #{forward.2} parent=1 // loop_header
      %s12 = sphi 0, %s16
      %p13 = scmp.ge.s32.totalorder %s12, 6
      %s19 = sphi 0, %s31
      %s20 = sphi 0, %s27
      %s21 = sphi 0, %s19
      %s22 = sphi 0, %s20
      %s23 = sphi 0, %s21
      %s24 = sphi 0, %s22
      %s36 = sphi 0, %s38
      %s39 = sphi 0, %s36
      %s40 = sphi 0, %s39
      %s56 = sphi 0, %s40
      %s64 = sphi 0, %s66
      %s67 = sphi 0, %s64
      %s68 = sphi 0, %s67
      %s84 = sphi 0, %s68
      %s90 = sphi 0, %s92
      %s93 = sphi 0, %s90
      %s94 = sphi 0, %s93
      %s110 = sphi 0, %s94
      %s116 = sphi 0, %s118
      %s119 = sphi 0, %s116
      %s120 = sphi 0, %s119
      %s136 = sphi 0, %s120
      %s142 = sphi 0, %s144
      %s145 = sphi 0, %s142
      %s146 = sphi 0, %s145
      %s162 = sphi 0, %s146
      %s168 = sphi 0, %s170
      %s171 = sphi 0, %s168
      %s172 = sphi 0, %s171
      %s188 = sphi 0, %s172
      %s194 = sphi 0, %s196
      %s197 = sphi 0, %s194
      %s198 = sphi 0, %s197
      %s214 = sphi 0, %s198
    $region4: #{forward.2} parent=1 // loop_header_branch
      %15 = sbr.rel (%p13) target = $region8
    $region5: #{forward.2} parent=1 // loop_body
      %s17 = ssub.s32 %s12, 1
      %s18 = ssub.s32 %s12, 2
      %s25 = sadd.s32 1, %s20
      %p26 = scmp.ge.s32.totalorder %s25, 2
      %s27 = scalar_select %p26, 0, %s25
      %s28 = sadd.s32 1, %s19
      %s29 = scalar_select %p26, %s28, %s19
      %p30 = scmp.ge.s32.totalorder %s29, 2
      %s31 = scalar_select %p30, 0, %s29
      %s32 = ssub.s32 %s19, %s31
      %s33 = ssub.s32 %s20, %s27
      %s34 = sor.u32 %s32, %s33
      %p35 = scmp.eq.s32.totalorder %s34, 0
      %s37 = sadd.s32 %s36, 1
      %s38 = scalar_select %p35, %s36, %s37
      %p41 = pneg %p35
      %p42 = scmp.eq.s32.totalorder %s12, 3
      %p43 = por %p41, %p42
      %p44 = scmp.ne.s32.totalorder %s36, %s39
      %p45 = scmp.eq.s32.totalorder %s12, 0
      %p46 = por %p44, %p45
      %p47 = scmp.ne.s32.totalorder %s36, %s39
      %p48 = scmp.eq.s32.totalorder %s17, 3
      %p49 = por %p47, %p48
      %p50 = scmp.ne.s32.totalorder %s39, %s40
      %p51 = scmp.eq.s32.totalorder %s17, 0
      %p52 = por %p50, %p51
      %p53 = scmp.ne.s32.totalorder %s39, %s40
      %p54 = scmp.eq.s32.totalorder %s18, 3
      %p55 = por %p53, %p54
      %p57 = scmp.ne.s32.totalorder %s40, %s56
      %p58 = scmp.eq.s32.totalorder %s18, 0
      %p59 = por %p57, %p58
      %s60 = ssub.s32 %s19, %s31
      %s61 = ssub.s32 %s20, %s27
      %s62 = sor.u32 %s60, %s61
      %p63 = scmp.eq.s32.totalorder %s62, 0
      %s65 = sadd.s32 %s64, 1
      %s66 = scalar_select %p63, %s64, %s65
      %p69 = pneg %p63
      %p70 = scmp.eq.s32.totalorder %s12, 3
      %p71 = por %p69, %p70
      %p72 = scmp.ne.s32.totalorder %s64, %s67
      %p73 = scmp.eq.s32.totalorder %s12, 0
      %p74 = por %p72, %p73
      %p75 = scmp.ne.s32.totalorder %s64, %s67
      %p76 = scmp.eq.s32.totalorder %s17, 3
      %p77 = por %p75, %p76
      %p78 = scmp.ne.s32.totalorder %s67, %s68
      %p79 = scmp.eq.s32.totalorder %s17, 0
      %p80 = por %p78, %p79
      %p81 = scmp.ne.s32.totalorder %s67, %s68
      %p82 = scmp.eq.s32.totalorder %s18, 3
      %p83 = por %p81, %p82
      %p85 = scmp.ne.s32.totalorder %s68, %s84
      %p86 = scmp.eq.s32.totalorder %s18, 0
      %p87 = por %p85, %p86
      %s88 = ssub.s32 %s19, %s31
      %p89 = scmp.eq.s32.totalorder %s88, 0
      %s91 = sadd.s32 %s90, 1
      %s92 = scalar_select %p89, %s90, %s91
      %p95 = pneg %p89
      %p96 = scmp.eq.s32.totalorder %s12, 3
      %p97 = por %p95, %p96
      %p98 = scmp.ne.s32.totalorder %s90, %s93
      %p99 = scmp.eq.s32.totalorder %s12, 0
      %p100 = por %p98, %p99
      %p101 = scmp.ne.s32.totalorder %s90, %s93
      %p102 = scmp.eq.s32.totalorder %s17, 3
      %p103 = por %p101, %p102
      %p104 = scmp.ne.s32.totalorder %s93, %s94
      %p105 = scmp.eq.s32.totalorder %s17, 0
      %p106 = por %p104, %p105
      %p107 = scmp.ne.s32.totalorder %s93, %s94
      %p108 = scmp.eq.s32.totalorder %s18, 3
      %p109 = por %p107, %p108
      %p111 = scmp.ne.s32.totalorder %s94, %s110
      %p112 = scmp.eq.s32.totalorder %s18, 0
      %p113 = por %p111, %p112
      %s114 = ssub.s32 %s19, %s31
      %p115 = scmp.eq.s32.totalorder %s114, 0
      %s117 = sadd.s32 %s116, 1
      %s118 = scalar_select %p115, %s116, %s117
      %p121 = pneg %p115
      %p122 = scmp.eq.s32.totalorder %s12, 3
      %p123 = por %p121, %p122
      %p124 = scmp.ne.s32.totalorder %s116, %s119
      %p125 = scmp.eq.s32.totalorder %s12, 0
      %p126 = por %p124, %p125
      %p127 = scmp.ne.s32.totalorder %s116, %s119
      %p128 = scmp.eq.s32.totalorder %s17, 3
      %p129 = por %p127, %p128
      %p130 = scmp.ne.s32.totalorder %s119, %s120
      %p131 = scmp.eq.s32.totalorder %s17, 0
      %p132 = por %p130, %p131
      %p133 = scmp.ne.s32.totalorder %s119, %s120
      %p134 = scmp.eq.s32.totalorder %s18, 3
      %p135 = por %p133, %p134
      %p137 = scmp.ne.s32.totalorder %s120, %s136
      %p138 = scmp.eq.s32.totalorder %s18, 0
      %p139 = por %p137, %p138
      %s140 = ssub.s32 %s20, %s27
      %p141 = scmp.eq.s32.totalorder %s140, 0
      %s143 = sadd.s32 %s142, 1
      %s144 = scalar_select %p141, %s142, %s143
      %p147 = pneg %p141
      %p148 = scmp.eq.s32.totalorder %s12, 3
      %p149 = por %p147, %p148
      %p150 = scmp.ne.s32.totalorder %s142, %s145
      %p151 = scmp.eq.s32.totalorder %s12, 0
      %p152 = por %p150, %p151
      %p153 = scmp.ne.s32.totalorder %s142, %s145
      %p154 = scmp.eq.s32.totalorder %s17, 3
      %p155 = por %p153, %p154
      %p156 = scmp.ne.s32.totalorder %s145, %s146
      %p157 = scmp.eq.s32.totalorder %s17, 0
      %p158 = por %p156, %p157
      %p159 = scmp.ne.s32.totalorder %s145, %s146
      %p160 = scmp.eq.s32.totalorder %s18, 3
      %p161 = por %p159, %p160
      %p163 = scmp.ne.s32.totalorder %s146, %s162
      %p164 = scmp.eq.s32.totalorder %s18, 0
      %p165 = por %p163, %p164
      %s166 = ssub.s32 %s20, %s27
      %p167 = scmp.eq.s32.totalorder %s166, 0
      %s169 = sadd.s32 %s168, 1
      %s170 = scalar_select %p167, %s168, %s169
      %p173 = pneg %p167
      %p174 = scmp.eq.s32.totalorder %s12, 3
      %p175 = por %p173, %p174
      %p176 = scmp.ne.s32.totalorder %s168, %s171
      %p177 = scmp.eq.s32.totalorder %s12, 0
      %p178 = por %p176, %p177
      %p179 = scmp.ne.s32.totalorder %s168, %s171
      %p180 = scmp.eq.s32.totalorder %s17, 3
      %p181 = por %p179, %p180
      %p182 = scmp.ne.s32.totalorder %s171, %s172
      %p183 = scmp.eq.s32.totalorder %s17, 0
      %p184 = por %p182, %p183
      %p185 = scmp.ne.s32.totalorder %s171, %s172
      %p186 = scmp.eq.s32.totalorder %s18, 3
      %p187 = por %p185, %p186
      %p189 = scmp.ne.s32.totalorder %s172, %s188
      %p190 = scmp.eq.s32.totalorder %s18, 0
      %p191 = por %p189, %p190
      %s192 = ssub.s32 %s19, %s31
      %p193 = scmp.eq.s32.totalorder %s192, 0
      %s195 = sadd.s32 %s194, 1
      %s196 = scalar_select %p193, %s194, %s195
      %p199 = pneg %p193
      %p200 = scmp.eq.s32.totalorder %s12, 3
      %p201 = por %p199, %p200
      %p202 = scmp.ne.s32.totalorder %s194, %s197
      %p203 = scmp.eq.s32.totalorder %s12, 0
      %p204 = por %p202, %p203
      %p205 = scmp.ne.s32.totalorder %s194, %s197
      %p206 = scmp.eq.s32.totalorder %s17, 3
      %p207 = por %p205, %p206
      %p208 = scmp.ne.s32.totalorder %s197, %s198
      %p209 = scmp.eq.s32.totalorder %s17, 0
      %p210 = por %p208, %p209
      %p211 = scmp.ne.s32.totalorder %s197, %s198
      %p212 = scmp.eq.s32.totalorder %s18, 3
      %p213 = por %p211, %p212
      %p215 = scmp.ne.s32.totalorder %s198, %s214
      %p216 = scmp.eq.s32.totalorder %s18, 0
      %p217 = por %p215, %p216
      %p218 = scmp.le.s32.totalorder 1, %s12
      %p219 = scmp.lt.s32.totalorder %s12, 5
      %p220 = pnand %p218, %p219
      %p221 = pneg %p220
      // Predicated region
      $region9: #{forward.2} parent=5 // pred_check
        _
      $region10: #{forward.2} parent=5 // pred_check_branch
        %223 = sbr.rel (%p220) target = $region12
      $region11: #{forward.2} parent=5 // pred_region
        %s224 = ssub.s32 %s12, 1
      $region12: #{forward.2} parent=5 // pred_fallthru
        _
      %p225 = scmp.lt.s32.totalorder %s12, 4
      // Predicated region
      $region13: #{forward.2} parent=5 // pred_check
        %p226 = pneg %p225
      $region14: #{forward.2} parent=5 // pred_check_branch
        %228 = sbr.rel (%p226) target = $region16
      $region15: #{forward.2} parent=5 // pred_region
        // Predicated region
        $region17: #{forward.2} parent=15 // pred_check
          %p229 = pneg %p46
        $region18: #{forward.2} parent=15 // pred_check_branch
          %231 = sbr.rel (%p229) target = $region20
        $region19: #{forward.2} parent=15 // pred_region
          %s232 = sand.u32 %s36, 1
          %s233 = sand.u32 %s36, 1
          %s234 = smul.addr %s233, 64
          %s235 = scalar_lea.vmem [#allocation4], %s234
          %s236 = smul.u32 16, %s19
          %s237 = smul.addr %s236, 2
          %s238 = sadd.s32 %s20, %s237
          %s239 = smul.addr %s238, 4
          %s240 = scalar_lea.vmem %s0, %s239
          // Predicated region
          $region21: #{forward.2} parent=19 // pred_check
            _
          $region22: #{forward.2} parent=19 // pred_check_branch
            %242 = sbr.rel (0) target = $region24
          $region23: #{forward.2} parent=19 // pred_region
            // Predicated region
            $region25: #{forward.2} parent=23 // pred_check
              _
            $region26: #{forward.2} parent=23 // pred_check_branch
              %244 = sbr.rel target = $region28
            $region27: #{forward.2} parent=23 // pred_region
              // Predicated region
              $region40: #{forward.2} parent=27 // pred_check
                _
              $region41: #{forward.2} parent=27 // pred_check_branch
                %290 = sbr.rel (0) target = $region43
              $region42: #{forward.2} parent=27 // pred_region
                loop: start=0, step=1, limit=1
                $region44: #{forward.2} parent=42 // loop_pre_header
                  _
                $region45: #{forward.2} parent=42 // loop_header
                  %s292 = sphi 0, %s296
                  %p293 = scmp.ge.s32.totalorder %s292, 1
                  %s297 = sphi %s240, %s240
                  %s298 = sphi %s235, %s235
                $region46: #{forward.2} parent=42 // loop_header_branch
                  %295 = sbr.rel (%p293) target = $region50
                $region47: #{forward.2} parent=42 // loop_body
                  _
                $region48: #{forward.2} parent=42 // loop_footer
                  %s296 = sadd.s32 1, %s292
                $region49: #{forward.2} parent=42 // loop_footer_branch
                  %291 = sbr.rel target = $region45
                $region50: #{forward.2} parent=42 // loop_exit
                  _
                %s300 = ssub.s32 16, 1
                loop: start=0, step=1, limit=1
                $region51: #{forward.2} parent=42 // loop_pre_header
                  _
                $region52: #{forward.2} parent=42 // loop_header
                  %s302 = sphi 0, %s306
                  %p303 = scmp.ge.s32.totalorder %s302, 1
                  %s307 = sphi %s240, %s240
                  %s308 = sphi %s235, %s235
                $region53: #{forward.2} parent=42 // loop_header_branch
                  %305 = sbr.rel (%p303) target = $region57
                $region54: #{forward.2} parent=42 // loop_body
                  %v309 = vld [vmem:[%s307] sm:%s300]
                  %310 = vst [vmem:[%s308] sm:%s300] %v309
                  %v311 = vld [vmem:[%s307 + $0x8] sm:%s300]
                  %312 = vst [vmem:[%s308 + $0x4] sm:%s300] %v311
                  %v313 = vld [vmem:[%s307 + $0x10] sm:%s300]
                  %314 = vst [vmem:[%s308 + $0x8] sm:%s300] %v313
                  %v315 = vld [vmem:[%s307 + $0x18] sm:%s300]
                  %316 = vst [vmem:[%s308 + $0xc] sm:%s300] %v315
                  %v317 = vld [vmem:[%s307 + $0x20] sm:%s300]
                  %318 = vst [vmem:[%s308 + $0x10] sm:%s300] %v317
                  %v319 = vld [vmem:[%s307 + $0x28] sm:%s300]
                  %320 = vst [vmem:[%s308 + $0x14] sm:%s300] %v319
                  %v321 = vld [vmem:[%s307 + $0x30] sm:%s300]
                  %322 = vst [vmem:[%s308 + $0x18] sm:%s300] %v321
                  %v323 = vld [vmem:[%s307 + $0x38] sm:%s300]
                  %324 = vst [vmem:[%s308 + $0x1c] sm:%s300] %v323
                  %v325 = vld [vmem:[%s307 + $0x40] sm:%s300]
                  %326 = vst [vmem:[%s308 + $0x20] sm:%s300] %v325
                  %v327 = vld [vmem:[%s307 + $0x48] sm:%s300]
                  %328 = vst [vmem:[%s308 + $0x24] sm:%s300] %v327
                  %v329 = vld [vmem:[%s307 + $0x50] sm:%s300]
                  %330 = vst [vmem:[%s308 + $0x28] sm:%s300] %v329
                  %v331 = vld [vmem:[%s307 + $0x58] sm:%s300]
                  %332 = vst [vmem:[%s308 + $0x2c] sm:%s300] %v331
                  %v333 = vld [vmem:[%s307 + $0x60] sm:%s300]
                  %334 = vst [vmem:[%s308 + $0x30] sm:%s300] %v333
                  %v335 = vld [vmem:[%s307 + $0x68] sm:%s300]
                  %336 = vst [vmem:[%s308 + $0x34] sm:%s300] %v335
                  %v337 = vld [vmem:[%s307 + $0x70] sm:%s300]
                  %338 = vst [vmem:[%s308 + $0x38] sm:%s300] %v337
                  %v339 = vld [vmem:[%s307 + $0x78] sm:%s300]
                  %340 = vst [vmem:[%s308 + $0x3c] sm:%s300] %v339
                $region55: #{forward.2} parent=42 // loop_footer
                  %s306 = sadd.s32 1, %s302
                $region56: #{forward.2} parent=42 // loop_footer_branch
                  %301 = sbr.rel target = $region52
                $region57: #{forward.2} parent=42 // loop_exit
                  _
              $region43: #{forward.2} parent=27 // pred_fallthru
                _
            $region28: #{forward.2} parent=23 // pred_fallthru
              _
            // Predicated region
            $region29: #{forward.2} parent=23 // pred_check
              _
            $region30: #{forward.2} parent=23 // pred_check_branch
              %246 = sbr.rel (0) target = $region32
            $region31: #{forward.2} parent=23 // pred_region
              %s248 = ssub.s32 16, 1
              loop: start=0, step=1, limit=1
              $region33: #{forward.2} parent=31 // loop_pre_header
                _
              $region34: #{forward.2} parent=31 // loop_header
                %s250 = sphi 0, %s254
                %p251 = scmp.ge.s32.totalorder %s250, 1
                %s255 = sphi %s240, %s240
                %s256 = sphi %s235, %s235
              $region35: #{forward.2} parent=31 // loop_header_branch
                %253 = sbr.rel (%p251) target = $region39
              $region36: #{forward.2} parent=31 // loop_body
                %v257 = vld [vmem:[%s255] sm:%s248]
                %258 = vst [vmem:[%s256] sm:%s248] %v257
                %v259 = vld [vmem:[%s255 + $0x8] sm:%s248]
                %260 = vst [vmem:[%s256 + $0x4] sm:%s248] %v259
                %v261 = vld [vmem:[%s255 + $0x10] sm:%s248]
                %262 = vst [vmem:[%s256 + $0x8] sm:%s248] %v261
                %v263 = vld [vmem:[%s255 + $0x18] sm:%s248]
                %264 = vst [vmem:[%s256 + $0xc] sm:%s248] %v263
                %v265 = vld [vmem:[%s255 + $0x20] sm:%s248]
                %266 = vst [vmem:[%s256 + $0x10] sm:%s248] %v265
                %v267 = vld [vmem:[%s255 + $0x28] sm:%s248]
                %268 = vst [vmem:[%s256 + $0x14] sm:%s248] %v267
                %v269 = vld [vmem:[%s255 + $0x30] sm:%s248]
                %270 = vst [vmem:[%s256 + $0x18] sm:%s248] %v269
                %v271 = vld [vmem:[%s255 + $0x38] sm:%s248]
                %272 = vst [vmem:[%s256 + $0x1c] sm:%s248] %v271
                %v273 = vld [vmem:[%s255 + $0x40] sm:%s248]
                %274 = vst [vmem:[%s256 + $0x20] sm:%s248] %v273
                %v275 = vld [vmem:[%s255 + $0x48] sm:%s248]
                %276 = vst [vmem:[%s256 + $0x24] sm:%s248] %v275
                %v277 = vld [vmem:[%s255 + $0x50] sm:%s248]
                %278 = vst [vmem:[%s256 + $0x28] sm:%s248] %v277
                %v279 = vld [vmem:[%s255 + $0x58] sm:%s248]
                %280 = vst [vmem:[%s256 + $0x2c] sm:%s248] %v279
                %v281 = vld [vmem:[%s255 + $0x60] sm:%s248]
                %282 = vst [vmem:[%s256 + $0x30] sm:%s248] %v281
                %v283 = vld [vmem:[%s255 + $0x68] sm:%s248]
                %284 = vst [vmem:[%s256 + $0x34] sm:%s248] %v283
                %v285 = vld [vmem:[%s255 + $0x70] sm:%s248]
                %286 = vst [vmem:[%s256 + $0x38] sm:%s248] %v285
                %v287 = vld [vmem:[%s255 + $0x78] sm:%s248]
                %288 = vst [vmem:[%s256 + $0x3c] sm:%s248] %v287
              $region37: #{forward.2} parent=31 // loop_footer
                %s254 = sadd.s32 1, %s250
              $region38: #{forward.2} parent=31 // loop_footer_branch
                %249 = sbr.rel target = $region34
              $region39: #{forward.2} parent=31 // loop_exit
                _
            $region32: #{forward.2} parent=23 // pred_fallthru
              _
          $region24: #{forward.2} parent=19 // pred_fallthru
            _
          %341 = vnop
        $region20: #{forward.2} parent=15 // pred_fallthru
          _
        // Predicated region
        $region58: #{forward.2} parent=15 // pred_check
          %p342 = pneg %p74
        $region59: #{forward.2} parent=15 // pred_check_branch
          %344 = sbr.rel (%p342) target = $region61
        $region60: #{forward.2} parent=15 // pred_region
          %s345 = sand.u32 %s64, 1
          %s346 = sand.u32 %s64, 1
          %s347 = smul.addr %s346, 64
          %s348 = scalar_lea.vmem [#allocation5], %s347
          %s349 = smul.u32 16, %s19
          %s350 = smul.addr %s349, 2
          %s351 = sadd.s32 %s20, %s350
          %s352 = smul.addr %s351, 4
          %s353 = scalar_lea.vmem %s1, %s352
          // Predicated region
          $region62: #{forward.2} parent=60 // pred_check
            _
          $region63: #{forward.2} parent=60 // pred_check_branch
            %355 = sbr.rel (0) target = $region65
          $region64: #{forward.2} parent=60 // pred_region
            // Predicated region
            $region66: #{forward.2} parent=64 // pred_check
              _
            $region67: #{forward.2} parent=64 // pred_check_branch
              %357 = sbr.rel target = $region69
            $region68: #{forward.2} parent=64 // pred_region
              // Predicated region
              $region81: #{forward.2} parent=68 // pred_check
                _
              $region82: #{forward.2} parent=68 // pred_check_branch
                %403 = sbr.rel (0) target = $region84
              $region83: #{forward.2} parent=68 // pred_region
                loop: start=0, step=1, limit=1
                $region85: #{forward.2} parent=83 // loop_pre_header
                  _
                $region86: #{forward.2} parent=83 // loop_header
                  %s405 = sphi 0, %s409
                  %p406 = scmp.ge.s32.totalorder %s405, 1
                  %s410 = sphi %s353, %s353
                  %s411 = sphi %s348, %s348
                $region87: #{forward.2} parent=83 // loop_header_branch
                  %408 = sbr.rel (%p406) target = $region91
                $region88: #{forward.2} parent=83 // loop_body
                  _
                $region89: #{forward.2} parent=83 // loop_footer
                  %s409 = sadd.s32 1, %s405
                $region90: #{forward.2} parent=83 // loop_footer_branch
                  %404 = sbr.rel target = $region86
                $region91: #{forward.2} parent=83 // loop_exit
                  _
                %s413 = ssub.s32 16, 1
                loop: start=0, step=1, limit=1
                $region92: #{forward.2} parent=83 // loop_pre_header
                  _
                $region93: #{forward.2} parent=83 // loop_header
                  %s415 = sphi 0, %s419
                  %p416 = scmp.ge.s32.totalorder %s415, 1
                  %s420 = sphi %s353, %s353
                  %s421 = sphi %s348, %s348
                $region94: #{forward.2} parent=83 // loop_header_branch
                  %418 = sbr.rel (%p416) target = $region98
                $region95: #{forward.2} parent=83 // loop_body
                  %v422 = vld [vmem:[%s420] sm:%s413]
                  %423 = vst [vmem:[%s421] sm:%s413] %v422
                  %v424 = vld [vmem:[%s420 + $0x8] sm:%s413]
                  %425 = vst [vmem:[%s421 + $0x4] sm:%s413] %v424
                  %v426 = vld [vmem:[%s420 + $0x10] sm:%s413]
                  %427 = vst [vmem:[%s421 + $0x8] sm:%s413] %v426
                  %v428 = vld [vmem:[%s420 + $0x18] sm:%s413]
                  %429 = vst [vmem:[%s421 + $0xc] sm:%s413] %v428
                  %v430 = vld [vmem:[%s420 + $0x20] sm:%s413]
                  %431 = vst [vmem:[%s421 + $0x10] sm:%s413] %v430
                  %v432 = vld [vmem:[%s420 + $0x28] sm:%s413]
                  %433 = vst [vmem:[%s421 + $0x14] sm:%s413] %v432
                  %v434 = vld [vmem:[%s420 + $0x30] sm:%s413]
                  %435 = vst [vmem:[%s421 + $0x18] sm:%s413] %v434
                  %v436 = vld [vmem:[%s420 + $0x38] sm:%s413]
                  %437 = vst [vmem:[%s421 + $0x1c] sm:%s413] %v436
                  %v438 = vld [vmem:[%s420 + $0x40] sm:%s413]
                  %439 = vst [vmem:[%s421 + $0x20] sm:%s413] %v438
                  %v440 = vld [vmem:[%s420 + $0x48] sm:%s413]
                  %441 = vst [vmem:[%s421 + $0x24] sm:%s413] %v440
                  %v442 = vld [vmem:[%s420 + $0x50] sm:%s413]
                  %443 = vst [vmem:[%s421 + $0x28] sm:%s413] %v442
                  %v444 = vld [vmem:[%s420 + $0x58] sm:%s413]
                  %445 = vst [vmem:[%s421 + $0x2c] sm:%s413] %v444
                  %v446 = vld [vmem:[%s420 + $0x60] sm:%s413]
                  %447 = vst [vmem:[%s421 + $0x30] sm:%s413] %v446
                  %v448 = vld [vmem:[%s420 + $0x68] sm:%s413]
                  %449 = vst [vmem:[%s421 + $0x34] sm:%s413] %v448
                  %v450 = vld [vmem:[%s420 + $0x70] sm:%s413]
                  %451 = vst [vmem:[%s421 + $0x38] sm:%s413] %v450
                  %v452 = vld [vmem:[%s420 + $0x78] sm:%s413]
                  %453 = vst [vmem:[%s421 + $0x3c] sm:%s413] %v452
                $region96: #{forward.2} parent=83 // loop_footer
                  %s419 = sadd.s32 1, %s415
                $region97: #{forward.2} parent=83 // loop_footer_branch
                  %414 = sbr.rel target = $region93
                $region98: #{forward.2} parent=83 // loop_exit
                  _
              $region84: #{forward.2} parent=68 // pred_fallthru
                _
            $region69: #{forward.2} parent=64 // pred_fallthru
              _
            // Predicated region
            $region70: #{forward.2} parent=64 // pred_check
              _
            $region71: #{forward.2} parent=64 // pred_check_branch
              %359 = sbr.rel (0) target = $region73
            $region72: #{forward.2} parent=64 // pred_region
              %s361 = ssub.s32 16, 1
              loop: start=0, step=1, limit=1
              $region74: #{forward.2} parent=72 // loop_pre_header
                _
              $region75: #{forward.2} parent=72 // loop_header
                %s363 = sphi 0, %s367
                %p364 = scmp.ge.s32.totalorder %s363, 1
                %s368 = sphi %s353, %s353
                %s369 = sphi %s348, %s348
              $region76: #{forward.2} parent=72 // loop_header_branch
                %366 = sbr.rel (%p364) target = $region80
              $region77: #{forward.2} parent=72 // loop_body
                %v370 = vld [vmem:[%s368] sm:%s361]
                %371 = vst [vmem:[%s369] sm:%s361] %v370
                %v372 = vld [vmem:[%s368 + $0x8] sm:%s361]
                %373 = vst [vmem:[%s369 + $0x4] sm:%s361] %v372
                %v374 = vld [vmem:[%s368 + $0x10] sm:%s361]
                %375 = vst [vmem:[%s369 + $0x8] sm:%s361] %v374
                %v376 = vld [vmem:[%s368 + $0x18] sm:%s361]
                %377 = vst [vmem:[%s369 + $0xc] sm:%s361] %v376
                %v378 = vld [vmem:[%s368 + $0x20] sm:%s361]
                %379 = vst [vmem:[%s369 + $0x10] sm:%s361] %v378
                %v380 = vld [vmem:[%s368 + $0x28] sm:%s361]
                %381 = vst [vmem:[%s369 + $0x14] sm:%s361] %v380
                %v382 = vld [vmem:[%s368 + $0x30] sm:%s361]
                %383 = vst [vmem:[%s369 + $0x18] sm:%s361] %v382
                %v384 = vld [vmem:[%s368 + $0x38] sm:%s361]
                %385 = vst [vmem:[%s369 + $0x1c] sm:%s361] %v384
                %v386 = vld [vmem:[%s368 + $0x40] sm:%s361]
                %387 = vst [vmem:[%s369 + $0x20] sm:%s361] %v386
                %v388 = vld [vmem:[%s368 + $0x48] sm:%s361]
                %389 = vst [vmem:[%s369 + $0x24] sm:%s361] %v388
                %v390 = vld [vmem:[%s368 + $0x50] sm:%s361]
                %391 = vst [vmem:[%s369 + $0x28] sm:%s361] %v390
                %v392 = vld [vmem:[%s368 + $0x58] sm:%s361]
                %393 = vst [vmem:[%s369 + $0x2c] sm:%s361] %v392
                %v394 = vld [vmem:[%s368 + $0x60] sm:%s361]
                %395 = vst [vmem:[%s369 + $0x30] sm:%s361] %v394
                %v396 = vld [vmem:[%s368 + $0x68] sm:%s361]
                %397 = vst [vmem:[%s369 + $0x34] sm:%s361] %v396
                %v398 = vld [vmem:[%s368 + $0x70] sm:%s361]
                %399 = vst [vmem:[%s369 + $0x38] sm:%s361] %v398
                %v400 = vld [vmem:[%s368 + $0x78] sm:%s361]
                %401 = vst [vmem:[%s369 + $0x3c] sm:%s361] %v400
              $region78: #{forward.2} parent=72 // loop_footer
                %s367 = sadd.s32 1, %s363
              $region79: #{forward.2} parent=72 // loop_footer_branch
                %362 = sbr.rel target = $region75
              $region80: #{forward.2} parent=72 // loop_exit
                _
            $region73: #{forward.2} parent=64 // pred_fallthru
              _
          $region65: #{forward.2} parent=60 // pred_fallthru
            _
          %454 = vnop
        $region61: #{forward.2} parent=15 // pred_fallthru
          _
        // Predicated region
        $region99: #{forward.2} parent=15 // pred_check
          %p455 = pneg %p100
        $region100: #{forward.2} parent=15 // pred_check_branch
          %457 = sbr.rel (%p455) target = $region102
        $region101: #{forward.2} parent=15 // pred_region
          %s458 = smul.u32 16, %s19
          %p459 = scmp.lt.s32.totalorder %s458, 31
          %s460 = scalar_select %p459, %s458, 31
          %s461 = smul.addr %s460, 8
          %s462 = scalar_lea.vmem %s2, %s461
          %s463 = smul.u32 16, %s19
        $region102: #{forward.2} parent=15 // pred_fallthru
          _
        // Predicated region
        $region103: #{forward.2} parent=15 // pred_check
          %p464 = pneg %p126
        $region104: #{forward.2} parent=15 // pred_check_branch
          %466 = sbr.rel (%p464) target = $region106
        $region105: #{forward.2} parent=15 // pred_region
          %s467 = smul.u32 16, %s19
          %p468 = scmp.lt.s32.totalorder %s467, 31
          %s469 = scalar_select %p468, %s467, 31
          %s470 = smul.addr %s469, 8
          %s471 = scalar_lea.vmem %s3, %s470
          %s472 = smul.u32 16, %s19
        $region106: #{forward.2} parent=15 // pred_fallthru
          _
        // Predicated region
        $region107: #{forward.2} parent=15 // pred_check
          %p473 = pneg %p152
        $region108: #{forward.2} parent=15 // pred_check_branch
          %475 = sbr.rel (%p473) target = $region110
        $region109: #{forward.2} parent=15 // pred_region
          %s476 = smul.u32 16, %s20
          %p477 = scmp.lt.s32.totalorder %s476, 31
          %s478 = scalar_select %p477, %s476, 31
          %s479 = smul.addr %s478, 4
          %s480 = scalar_lea.vmem %s4, %s479
          %s481 = smul.u32 16, %s20
        $region110: #{forward.2} parent=15 // pred_fallthru
          _
        // Predicated region
        $region111: #{forward.2} parent=15 // pred_check
          %p482 = pneg %p178
        $region112: #{forward.2} parent=15 // pred_check_branch
          %484 = sbr.rel (%p482) target = $region114
        $region113: #{forward.2} parent=15 // pred_region
          %s485 = smul.u32 16, %s20
          %p486 = scmp.lt.s32.totalorder %s485, 31
          %s487 = scalar_select %p486, %s485, 31
          %s488 = smul.addr %s487, 4
          %s489 = scalar_lea.vmem %s5, %s488
          %s490 = smul.u32 16, %s20
        $region114: #{forward.2} parent=15 // pred_fallthru
          _
      $region16: #{forward.2} parent=5 // pred_fallthru
        _
      %p491 = scmp.le.s32.totalorder 1, %s12
      %p492 = scmp.lt.s32.totalorder %s12, 5
      %p493 = pnand %p491, %p492
      %p494 = pneg %p493
      // Predicated region
      $region115: #{forward.2} parent=5 // pred_check
        _
      $region116: #{forward.2} parent=5 // pred_check_branch
        %496 = sbr.rel (%p493) target = $region118
      $region117: #{forward.2} parent=5 // pred_region
        %s497 = ssub.s32 %s12, 1
        %s498 = sand.u32 %s39, 1
        %s499 = sand.u32 %s39, 1
        %s500 = smul.addr %s499, 64
        %s501 = scalar_lea.vmem [#allocation4], %s500
        // Predicated region
        $region119: #{forward.2} parent=117 // pred_check
          %p502 = pneg %p52
        $region120: #{forward.2} parent=117 // pred_check_branch
          %504 = sbr.rel (%p502) target = $region122
        $region121: #{forward.2} parent=117 // pred_region
          _
        $region122: #{forward.2} parent=117 // pred_fallthru
          _
        %s505 = sand.u32 %s67, 1
        %s506 = sand.u32 %s67, 1
        %s507 = smul.addr %s506, 64
        %s508 = scalar_lea.vmem [#allocation5], %s507
        // Predicated region
        $region123: #{forward.2} parent=117 // pred_check
          %p509 = pneg %p80
        $region124: #{forward.2} parent=117 // pred_check_branch
          %511 = sbr.rel (%p509) target = $region126
        $region125: #{forward.2} parent=117 // pred_region
          _
        $region126: #{forward.2} parent=117 // pred_fallthru
          _
        %s512 = sand.u32 %s39, 1
        %s513 = sand.u32 %s39, 1
        %s514 = smul.addr %s513, 64
        %s515 = scalar_lea.vmem [#allocation4], %s514
        %p516 = pneg %p52
        %p517 = pneg %p49
        %s518 = sand.u32 %s67, 1
        %s519 = sand.u32 %s67, 1
        %s520 = smul.addr %s519, 64
        %s521 = scalar_lea.vmem [#allocation5], %s520
        %p522 = pneg %p80
        %p523 = pneg %p77
        %s524 = smul.u32 16, %s21
        %p525 = scmp.lt.s32.totalorder %s524, 31
        %s526 = scalar_select %p525, %s524, 31
        %s527 = smul.addr %s526, 8
        %s528 = scalar_lea.vmem %s2, %s527
        %p529 = pneg %p106
        %p530 = pneg %p103
        %s531 = smul.u32 16, %s21
        %p532 = scmp.lt.s32.totalorder %s531, 31
        %s533 = scalar_select %p532, %s531, 31
        %s534 = smul.addr %s533, 8
        %s535 = scalar_lea.vmem %s3, %s534
        %p536 = pneg %p132
        %p537 = pneg %p129
        %s538 = smul.u32 16, %s22
        %p539 = scmp.lt.s32.totalorder %s538, 31
        %s540 = scalar_select %p539, %s538, 31
        %s541 = smul.addr %s540, 4
        %s542 = scalar_lea.vmem %s4, %s541
        %p543 = pneg %p158
        %p544 = pneg %p155
        %s545 = smul.u32 16, %s22
        %p546 = scmp.lt.s32.totalorder %s545, 31
        %s547 = scalar_select %p546, %s545, 31
        %s548 = smul.addr %s547, 4
        %s549 = scalar_lea.vmem %s5, %s548
        %p550 = pneg %p184
        %p551 = pneg %p181
        %p552 = pneg %p210
        %p553 = pneg %p207
        %s554 = smul.u32 16, %s21
        %p555 = scmp.lt.s32.totalorder %s554, 31
        %s556 = scalar_select %p555, %s554, 31
        %s557 = smul.addr %s556, 8
        %s558 = scalar_lea.vmem %s6, %s557
        %s559 = smul.u32 16, %s21
        %s560 = smul.u32 16, %s21
        %s561 = smul.u32 16, %s21
        %p562 = scmp.lt.s32.totalorder %s561, 31
        %s563 = scalar_select %p562, %s561, 31
        %s564 = smul.addr %s563, 8
        %s565 = scalar_lea.vmem %s2, %s564
        %s566 = smul.u32 16, %s21
        %s567 = smul.u32 16, %s21
        %p568 = scmp.lt.s32.totalorder %s567, 31
        %s569 = scalar_select %p568, %s567, 31
        %s570 = smul.addr %s569, 8
        %s571 = scalar_lea.vmem %s3, %s570
        %s572 = smul.u32 16, %s21
        %s573 = smul.u32 16, %s22
        %p574 = scmp.lt.s32.totalorder %s573, 31
        %s575 = scalar_select %p574, %s573, 31
        %s576 = smul.addr %s575, 4
        %s577 = scalar_lea.vmem %s4, %s576
        %s578 = smul.u32 16, %s22
        %s579 = smul.u32 16, %s22
        %p580 = scmp.lt.s32.totalorder %s579, 31
        %s581 = scalar_select %p580, %s579, 31
        %s582 = smul.addr %s581, 4
        %s583 = scalar_lea.vmem %s5, %s582
        %s584 = smul.u32 16, %s22
        %s585 = smul.u32 16, %s21
        %p586 = scmp.lt.s32.totalorder %s585, 31
        %s587 = scalar_select %p586, %s585, 31
        %s588 = smul.addr %s587, 8
        %s589 = scalar_lea.vmem %s6, %s588
        %s590 = smul.u32 16, %s21
        %p592 = scmp.eq.s32.totalorder %s22, 0
        // Predicated region
        $region127: #{forward.2} parent=117 // pred_check
          %p593 = pneg %p592
        $region128: #{forward.2} parent=117 // pred_check_branch
          %595 = sbr.rel (%p593) target = $region130
        $region129: #{forward.2} parent=117 // pred_region
          %vm596 = vcmask 523264
          %597 = vst.msk [vmem:[#allocation2] sm:$0xff] %vm596, 0.0
          %598 = vst.msk [vmem:[#allocation2 + $0x8] sm:$0xff] %vm596, 0.0
          %599 = vst.msk [vmem:[#allocation2 + $0x10] sm:$0xff] %vm596, 0.0
          %600 = vst.msk [vmem:[#allocation2 + $0x18] sm:$0xff] %vm596, 0.0
          %601 = vst.msk [vmem:[#allocation2 + $0x20] sm:$0xff] %vm596, 0.0
          %602 = vst.msk [vmem:[#allocation2 + $0x28] sm:$0xff] %vm596, 0.0
          %603 = vst.msk [vmem:[#allocation2 + $0x30] sm:$0xff] %vm596, 0.0
          %604 = vst.msk [vmem:[#allocation2 + $0x38] sm:$0xff] %vm596, 0.0
          %605 = vst.msk [vmem:[#allocation2 + $0x40] sm:$0xff] %vm596, 0.0
          %606 = vst.msk [vmem:[#allocation2 + $0x48] sm:$0xff] %vm596, 0.0
          %607 = vst.msk [vmem:[#allocation2 + $0x50] sm:$0xff] %vm596, 0.0
          %608 = vst.msk [vmem:[#allocation2 + $0x58] sm:$0xff] %vm596, 0.0
          %609 = vst.msk [vmem:[#allocation2 + $0x60] sm:$0xff] %vm596, 0.0
          %610 = vst.msk [vmem:[#allocation2 + $0x68] sm:$0xff] %vm596, 0.0
          %611 = vst.msk [vmem:[#allocation2 + $0x70] sm:$0xff] %vm596, 0.0
          %612 = vst.msk [vmem:[#allocation2 + $0x78] sm:$0xff] %vm596, 0.0
          %613 = vst.msk [vmem:[#allocation3] sm:$0xff] %vm596, 0.0
          %614 = vst.msk [vmem:[#allocation3 + $0x8] sm:$0xff] %vm596, 0.0
          %615 = vst.msk [vmem:[#allocation3 + $0x10] sm:$0xff] %vm596, 0.0
          %616 = vst.msk [vmem:[#allocation3 + $0x18] sm:$0xff] %vm596, 0.0
          %617 = vst.msk [vmem:[#allocation3 + $0x20] sm:$0xff] %vm596, 0.0
          %618 = vst.msk [vmem:[#allocation3 + $0x28] sm:$0xff] %vm596, 0.0
          %619 = vst.msk [vmem:[#allocation3 + $0x30] sm:$0xff] %vm596, 0.0
          %620 = vst.msk [vmem:[#allocation3 + $0x38] sm:$0xff] %vm596, 0.0
          %621 = vst.msk [vmem:[#allocation3 + $0x40] sm:$0xff] %vm596, 0.0
          %622 = vst.msk [vmem:[#allocation3 + $0x48] sm:$0xff] %vm596, 0.0
          %623 = vst.msk [vmem:[#allocation3 + $0x50] sm:$0xff] %vm596, 0.0
          %624 = vst.msk [vmem:[#allocation3 + $0x58] sm:$0xff] %vm596, 0.0
          %625 = vst.msk [vmem:[#allocation3 + $0x60] sm:$0xff] %vm596, 0.0
          %626 = vst.msk [vmem:[#allocation3 + $0x68] sm:$0xff] %vm596, 0.0
          %627 = vst.msk [vmem:[#allocation3 + $0x70] sm:$0xff] %vm596, 0.0
          %628 = vst.msk [vmem:[#allocation3 + $0x78] sm:$0xff] %vm596, 0.0
        $region130: #{forward.2} parent=117 // pred_fallthru
          _
        %v629 = vld [vmem:[#allocation2] sm:$0xff]
        %v630 = vld [vmem:[#allocation2 + $0x8] sm:$0xff]
        %v631 = vld [vmem:[#allocation2 + $0x10] sm:$0xff]
        %v632 = vld [vmem:[#allocation2 + $0x18] sm:$0xff]
        %v633 = vld [vmem:[#allocation2 + $0x20] sm:$0xff]
        %v634 = vld [vmem:[#allocation2 + $0x28] sm:$0xff]
        %v635 = vld [vmem:[#allocation2 + $0x30] sm:$0xff]
        %v636 = vld [vmem:[#allocation2 + $0x38] sm:$0xff]
        %v637 = vld [vmem:[#allocation2 + $0x40] sm:$0xff]
        %v638 = vld [vmem:[#allocation2 + $0x48] sm:$0xff]
        %v639 = vld [vmem:[#allocation2 + $0x50] sm:$0xff]
        %v640 = vld [vmem:[#allocation2 + $0x58] sm:$0xff]
        %v641 = vld [vmem:[#allocation2 + $0x60] sm:$0xff]
        %v642 = vld [vmem:[#allocation2 + $0x68] sm:$0xff]
        %v643 = vld [vmem:[#allocation2 + $0x70] sm:$0xff]
        %v644 = vld [vmem:[#allocation2 + $0x78] sm:$0xff]
        %v645 = vld [vmem:[%s501] sm:$0xf]
        %v646 = vld [vmem:[%s501 + $0x4] sm:$0xf]
        %v647 = vld [vmem:[%s501 + $0x8] sm:$0xf]
        %v648 = vld [vmem:[%s501 + $0xc] sm:$0xf]
        %v649 = vld [vmem:[%s501 + $0x10] sm:$0xf]
        %v650 = vld [vmem:[%s501 + $0x14] sm:$0xf]
        %v651 = vld [vmem:[%s501 + $0x18] sm:$0xf]
        %v652 = vld [vmem:[%s501 + $0x1c] sm:$0xf]
        %v653 = vld [vmem:[%s501 + $0x20] sm:$0xf]
        %v654 = vld [vmem:[%s501 + $0x24] sm:$0xf]
        %v655 = vld [vmem:[%s501 + $0x28] sm:$0xf]
        %v656 = vld [vmem:[%s501 + $0x2c] sm:$0xf]
        %v657 = vld [vmem:[%s501 + $0x30] sm:$0xf]
        %v658 = vld [vmem:[%s501 + $0x34] sm:$0xf]
        %v659 = vld [vmem:[%s501 + $0x38] sm:$0xf]
        %v660 = vld [vmem:[%s501 + $0x3c] sm:$0xf]
        %v661 = vld [vmem:[%s577] sm:$0xf]
        %v662 = vld [vmem:[%s577 + $0x4] sm:$0xf]
        %v663 = vld [vmem:[%s577 + $0x8] sm:$0xf]
        %v664 = vld [vmem:[%s577 + $0xc] sm:$0xf]
        %v665 = vld [vmem:[%s577 + $0x10] sm:$0xf]
        %v666 = vld [vmem:[%s577 + $0x14] sm:$0xf]
        %v667 = vld [vmem:[%s577 + $0x18] sm:$0xf]
        %v668 = vld [vmem:[%s577 + $0x1c] sm:$0xf]
        %v669 = vld [vmem:[%s577 + $0x20] sm:$0xf]
        %v670 = vld [vmem:[%s577 + $0x24] sm:$0xf]
        %v671 = vld [vmem:[%s577 + $0x28] sm:$0xf]
        %v672 = vld [vmem:[%s577 + $0x2c] sm:$0xf]
        %v673 = vld [vmem:[%s577 + $0x30] sm:$0xf]
        %v674 = vld [vmem:[%s577 + $0x34] sm:$0xf]
        %v675 = vld [vmem:[%s577 + $0x38] sm:$0xf]
        %v676 = vld [vmem:[%s577 + $0x3c] sm:$0xf]
        %v693 = vunpack.c.l.b16 %v645
        %v694 = vunpack.c.l.b16 %v646
        %v695 = vunpack.c.l.b16 %v647
        %v696 = vunpack.c.l.b16 %v648
        %v697 = vunpack.c.l.b16 %v649
        %v698 = vunpack.c.l.b16 %v650
        %v699 = vunpack.c.l.b16 %v651
        %v700 = vunpack.c.l.b16 %v652
        %v701 = vunpack.c.l.b16 %v653
        %v702 = vunpack.c.l.b16 %v654
        %v703 = vunpack.c.l.b16 %v655
        %v704 = vunpack.c.l.b16 %v656
        %v705 = vunpack.c.l.b16 %v657
        %v706 = vunpack.c.l.b16 %v658
        %v707 = vunpack.c.l.b16 %v659
        %v708 = vunpack.c.l.b16 %v660
        %v709 = vpack.c.b16 %v694, %v693
        %v710 = vpack.c.b16 %v696, %v695
        %v711 = vpack.c.b16 %v698, %v697
        %v712 = vpack.c.b16 %v700, %v699
        %v713 = vpack.c.b16 %v702, %v701
        %v714 = vpack.c.b16 %v704, %v703
        %v715 = vpack.c.b16 %v706, %v705
        %v716 = vpack.c.b16 %v708, %v707
        %v741 = vunpack.c.l.b16 %v661
        %v742 = vunpack.c.l.b16 %v662
        %v743 = vunpack.c.l.b16 %v663
        %v744 = vunpack.c.l.b16 %v664
        %v745 = vunpack.c.l.b16 %v665
        %v746 = vunpack.c.l.b16 %v666
        %v747 = vunpack.c.l.b16 %v667
        %v748 = vunpack.c.l.b16 %v668
        %v749 = vunpack.c.l.b16 %v669
        %v750 = vunpack.c.l.b16 %v670
        %v751 = vunpack.c.l.b16 %v671
        %v752 = vunpack.c.l.b16 %v672
        %v753 = vunpack.c.l.b16 %v673
        %v754 = vunpack.c.l.b16 %v674
        %v755 = vunpack.c.l.b16 %v675
        %v756 = vunpack.c.l.b16 %v676
        %v757 = vpack.c.b16 %v742, %v741
        %v758 = vpack.c.b16 %v744, %v743
        %v759 = vpack.c.b16 %v746, %v745
        %v760 = vpack.c.b16 %v748, %v747
        %v761 = vpack.c.b16 %v750, %v749
        %v762 = vpack.c.b16 %v752, %v751
        %v763 = vpack.c.b16 %v754, %v753
        %v764 = vpack.c.b16 %v756, %v755
        %773 = vmatprep.subr.bf16.mxu0 0
        %774 = vmatpush1.bf16.msra.mxu0 %v764
        %775 = vmatprep.subr.bf16.mxu0 0
        %776 = vmatpush1.bf16.msra.mxu0 %v763
        %777 = vmatprep.subr.bf16.mxu0 0
        %778 = vmatpush1.bf16.msra.mxu0 %v762
        %779 = vmatprep.subr.bf16.mxu0 0
        %780 = vmatpush1.bf16.msra.mxu0 %v761
        %781 = vmatprep.subr.bf16.mxu0 0
        %782 = vmatpush1.bf16.msra.mxu0 %v760
        %783 = vmatprep.subr.bf16.mxu0 0
        %784 = vmatpush1.bf16.msra.mxu0 %v759
        %785 = vmatprep.subr.bf16.mxu0 0
        %786 = vmatpush1.bf16.msra.mxu0 %v758
        %787 = vmatprep.subr.bf16.mxu0 0
        %788 = vmatpush1.bf16.msra.mxu0 %v757
        %789 = vmatprep.subr.bf16.mxu0 0
        %790 = vmatpush2.bf16.msra.mxu0 0
        %791 = vmatprep.subr.bf16.mxu0 0
        %792 = vmatpush2.bf16.msra.mxu0 0
        %793 = vmatprep.subr.bf16.mxu0 0
        %794 = vmatpush2.bf16.msra.mxu0 0
        %795 = vmatprep.subr.bf16.mxu0 0
        %796 = vmatpush2.bf16.msra.mxu0 0
        %797 = vmatprep.subr.bf16.mxu0 0
        %798 = vmatpush2.bf16.msra.mxu0 0
        %799 = vmatprep.subr.bf16.mxu0 0
        %800 = vmatpush2.bf16.msra.mxu0 0
        %801 = vmatprep.subr.bf16.mxu0 0
        %802 = vmatpush2.bf16.msra.mxu0 0
        %803 = vmatprep.subr.bf16.mxu0 0
        %804 = vmatpush2.bf16.msra.mxu0 0
        %805 = vmatprep.mubr.bf16.mxu0 0
        %806 = vmatmul.mubr.bf16.gmra.mxu0 %v709
        %v807 = vpop.f32.mrf.mxu0
        %v808 = vadd.f32 0.0, %v807
        %v809 = vpop.f32.mrf.mxu0
        %v810 = vpop.f32.mrf.mxu0
        %v811 = vadd.f32 0.0, %v810
        %v812 = vpop.f32.mrf.mxu0
        %813 = vmatprep.mubr.bf16.mxu0 0
        %814 = vmatmul.mubr.bf16.gmra.mxu0 %v710
        %v815 = vpop.f32.mrf.mxu0
        %v816 = vadd.f32 0.0, %v815
        %v817 = vpop.f32.mrf.mxu0
        %v818 = vpop.f32.mrf.mxu0
        %v819 = vadd.f32 0.0, %v818
        %v820 = vpop.f32.mrf.mxu0
        %821 = vmatprep.mubr.bf16.mxu0 0
        %822 = vmatmul.mubr.bf16.gmra.mxu0 %v711
        %v823 = vpop.f32.mrf.mxu0
        %v824 = vadd.f32 0.0, %v823
        %v825 = vpop.f32.mrf.mxu0
        %v826 = vpop.f32.mrf.mxu0
        %v827 = vadd.f32 0.0, %v826
        %v828 = vpop.f32.mrf.mxu0
        %829 = vmatprep.mubr.bf16.mxu0 0
        %830 = vmatmul.mubr.bf16.gmra.mxu0 %v712
        %v831 = vpop.f32.mrf.mxu0
        %v832 = vadd.f32 0.0, %v831
        %v833 = vpop.f32.mrf.mxu0
        %v834 = vpop.f32.mrf.mxu0
        %v835 = vadd.f32 0.0, %v834
        %v836 = vpop.f32.mrf.mxu0
        %837 = vmatprep.mubr.bf16.mxu0 0
        %838 = vmatmul.mubr.bf16.gmra.mxu0 %v713
        %v839 = vpop.f32.mrf.mxu0
        %v840 = vadd.f32 0.0, %v839
        %v841 = vpop.f32.mrf.mxu0
        %v842 = vpop.f32.mrf.mxu0
        %v843 = vadd.f32 0.0, %v842
        %v844 = vpop.f32.mrf.mxu0
        %845 = vmatprep.mubr.bf16.mxu0 0
        %846 = vmatmul.mubr.bf16.gmra.mxu0 %v714
        %v847 = vpop.f32.mrf.mxu0
        %v848 = vadd.f32 0.0, %v847
        %v849 = vpop.f32.mrf.mxu0
        %v850 = vpop.f32.mrf.mxu0
        %v851 = vadd.f32 0.0, %v850
        %v852 = vpop.f32.mrf.mxu0
        %853 = vmatprep.mubr.bf16.mxu0 0
        %854 = vmatmul.mubr.bf16.gmra.mxu0 %v715
        %v855 = vpop.f32.mrf.mxu0
        %v856 = vadd.f32 0.0, %v855
        %v857 = vpop.f32.mrf.mxu0
        %v858 = vpop.f32.mrf.mxu0
        %v859 = vadd.f32 0.0, %v858
        %v860 = vpop.f32.mrf.mxu0
        %861 = vmatprep.mubr.bf16.mxu0 0
        %862 = vmatmul.mubr.bf16.gmra.mxu0 %v716
        %v863 = vpop.f32.mrf.mxu0
        %v864 = vadd.f32 0.0, %v863
        %v865 = vpop.f32.mrf.mxu0
        %v866 = vpop.f32.mrf.mxu0
        %v867 = vadd.f32 0.0, %v866
        %v868 = vpop.f32.mrf.mxu0
        %869 = vdwg.mxu0
        %v870 = vadd.f32 %v629, %v808
        %v871 = vadd.f32 %v630, %v811
        %v872 = vadd.f32 %v631, %v816
        %v873 = vadd.f32 %v632, %v819
        %v874 = vadd.f32 %v633, %v824
        %v875 = vadd.f32 %v634, %v827
        %v876 = vadd.f32 %v635, %v832
        %v877 = vadd.f32 %v636, %v835
        %v878 = vadd.f32 %v637, %v840
        %v879 = vadd.f32 %v638, %v843
        %v880 = vadd.f32 %v639, %v848
        %v881 = vadd.f32 %v640, %v851
        %v882 = vadd.f32 %v641, %v856
        %v883 = vadd.f32 %v642, %v859
        %v884 = vadd.f32 %v643, %v864
        %v885 = vadd.f32 %v644, %v867
        %vm886 = vcmask 523264
        %887 = vst.msk [vmem:[#allocation2] sm:$0xff] %vm886, %v870
        %888 = vst.msk [vmem:[#allocation2 + $0x8] sm:$0xff] %vm886, %v871
        %889 = vst.msk [vmem:[#allocation2 + $0x10] sm:$0xff] %vm886, %v872
        %890 = vst.msk [vmem:[#allocation2 + $0x18] sm:$0xff] %vm886, %v873
        %891 = vst.msk [vmem:[#allocation2 + $0x20] sm:$0xff] %vm886, %v874
        %892 = vst.msk [vmem:[#allocation2 + $0x28] sm:$0xff] %vm886, %v875
        %893 = vst.msk [vmem:[#allocation2 + $0x30] sm:$0xff] %vm886, %v876
        %894 = vst.msk [vmem:[#allocation2 + $0x38] sm:$0xff] %vm886, %v877
        %895 = vst.msk [vmem:[#allocation2 + $0x40] sm:$0xff] %vm886, %v878
        %896 = vst.msk [vmem:[#allocation2 + $0x48] sm:$0xff] %vm886, %v879
        %897 = vst.msk [vmem:[#allocation2 + $0x50] sm:$0xff] %vm886, %v880
        %898 = vst.msk [vmem:[#allocation2 + $0x58] sm:$0xff] %vm886, %v881
        %899 = vst.msk [vmem:[#allocation2 + $0x60] sm:$0xff] %vm886, %v882
        %900 = vst.msk [vmem:[#allocation2 + $0x68] sm:$0xff] %vm886, %v883
        %901 = vst.msk [vmem:[#allocation2 + $0x70] sm:$0xff] %vm886, %v884
        %902 = vst.msk [vmem:[#allocation2 + $0x78] sm:$0xff] %vm886, %v885
        %v903 = vld [vmem:[#allocation3] sm:$0xff]
        %v904 = vld [vmem:[#allocation3 + $0x8] sm:$0xff]
        %v905 = vld [vmem:[#allocation3 + $0x10] sm:$0xff]
        %v906 = vld [vmem:[#allocation3 + $0x18] sm:$0xff]
        %v907 = vld [vmem:[#allocation3 + $0x20] sm:$0xff]
        %v908 = vld [vmem:[#allocation3 + $0x28] sm:$0xff]
        %v909 = vld [vmem:[#allocation3 + $0x30] sm:$0xff]
        %v910 = vld [vmem:[#allocation3 + $0x38] sm:$0xff]
        %v911 = vld [vmem:[#allocation3 + $0x40] sm:$0xff]
        %v912 = vld [vmem:[#allocation3 + $0x48] sm:$0xff]
        %v913 = vld [vmem:[#allocation3 + $0x50] sm:$0xff]
        %v914 = vld [vmem:[#allocation3 + $0x58] sm:$0xff]
        %v915 = vld [vmem:[#allocation3 + $0x60] sm:$0xff]
        %v916 = vld [vmem:[#allocation3 + $0x68] sm:$0xff]
        %v917 = vld [vmem:[#allocation3 + $0x70] sm:$0xff]
        %v918 = vld [vmem:[#allocation3 + $0x78] sm:$0xff]
        %v919 = vld [vmem:[%s508] sm:$0xf]
        %v920 = vld [vmem:[%s508 + $0x4] sm:$0xf]
        %v921 = vld [vmem:[%s508 + $0x8] sm:$0xf]
        %v922 = vld [vmem:[%s508 + $0xc] sm:$0xf]
        %v923 = vld [vmem:[%s508 + $0x10] sm:$0xf]
        %v924 = vld [vmem:[%s508 + $0x14] sm:$0xf]
        %v925 = vld [vmem:[%s508 + $0x18] sm:$0xf]
        %v926 = vld [vmem:[%s508 + $0x1c] sm:$0xf]
        %v927 = vld [vmem:[%s508 + $0x20] sm:$0xf]
        %v928 = vld [vmem:[%s508 + $0x24] sm:$0xf]
        %v929 = vld [vmem:[%s508 + $0x28] sm:$0xf]
        %v930 = vld [vmem:[%s508 + $0x2c] sm:$0xf]
        %v931 = vld [vmem:[%s508 + $0x30] sm:$0xf]
        %v932 = vld [vmem:[%s508 + $0x34] sm:$0xf]
        %v933 = vld [vmem:[%s508 + $0x38] sm:$0xf]
        %v934 = vld [vmem:[%s508 + $0x3c] sm:$0xf]
        %v935 = vld [vmem:[%s583] sm:$0xf]
        %v936 = vld [vmem:[%s583 + $0x4] sm:$0xf]
        %v937 = vld [vmem:[%s583 + $0x8] sm:$0xf]
        %v938 = vld [vmem:[%s583 + $0xc] sm:$0xf]
        %v939 = vld [vmem:[%s583 + $0x10] sm:$0xf]
        %v940 = vld [vmem:[%s583 + $0x14] sm:$0xf]
        %v941 = vld [vmem:[%s583 + $0x18] sm:$0xf]
        %v942 = vld [vmem:[%s583 + $0x1c] sm:$0xf]
        %v943 = vld [vmem:[%s583 + $0x20] sm:$0xf]
        %v944 = vld [vmem:[%s583 + $0x24] sm:$0xf]
        %v945 = vld [vmem:[%s583 + $0x28] sm:$0xf]
        %v946 = vld [vmem:[%s583 + $0x2c] sm:$0xf]
        %v947 = vld [vmem:[%s583 + $0x30] sm:$0xf]
        %v948 = vld [vmem:[%s583 + $0x34] sm:$0xf]
        %v949 = vld [vmem:[%s583 + $0x38] sm:$0xf]
        %v950 = vld [vmem:[%s583 + $0x3c] sm:$0xf]
        %v967 = vunpack.c.l.b16 %v919
        %v968 = vunpack.c.l.b16 %v920
        %v969 = vunpack.c.l.b16 %v921
        %v970 = vunpack.c.l.b16 %v922
        %v971 = vunpack.c.l.b16 %v923
        %v972 = vunpack.c.l.b16 %v924
        %v973 = vunpack.c.l.b16 %v925
        %v974 = vunpack.c.l.b16 %v926
        %v975 = vunpack.c.l.b16 %v927
        %v976 = vunpack.c.l.b16 %v928
        %v977 = vunpack.c.l.b16 %v929
        %v978 = vunpack.c.l.b16 %v930
        %v979 = vunpack.c.l.b16 %v931
        %v980 = vunpack.c.l.b16 %v932
        %v981 = vunpack.c.l.b16 %v933
        %v982 = vunpack.c.l.b16 %v934
        %v983 = vpack.c.b16 %v968, %v967
        %v984 = vpack.c.b16 %v970, %v969
        %v985 = vpack.c.b16 %v972, %v971
        %v986 = vpack.c.b16 %v974, %v973
        %v987 = vpack.c.b16 %v976, %v975
        %v988 = vpack.c.b16 %v978, %v977
        %v989 = vpack.c.b16 %v980, %v979
        %v990 = vpack.c.b16 %v982, %v981
        %v1015 = vunpack.c.l.b16 %v935
        %v1016 = vunpack.c.l.b16 %v936
        %v1017 = vunpack.c.l.b16 %v937
        %v1018 = vunpack.c.l.b16 %v938
        %v1019 = vunpack.c.l.b16 %v939
        %v1020 = vunpack.c.l.b16 %v940
        %v1021 = vunpack.c.l.b16 %v941
        %v1022 = vunpack.c.l.b16 %v942
        %v1023 = vunpack.c.l.b16 %v943
        %v1024 = vunpack.c.l.b16 %v944
        %v1025 = vunpack.c.l.b16 %v945
        %v1026 = vunpack.c.l.b16 %v946
        %v1027 = vunpack.c.l.b16 %v947
        %v1028 = vunpack.c.l.b16 %v948
        %v1029 = vunpack.c.l.b16 %v949
        %v1030 = vunpack.c.l.b16 %v950
        %v1031 = vpack.c.b16 %v1016, %v1015
        %v1032 = vpack.c.b16 %v1018, %v1017
        %v1033 = vpack.c.b16 %v1020, %v1019
        %v1034 = vpack.c.b16 %v1022, %v1021
        %v1035 = vpack.c.b16 %v1024, %v1023
        %v1036 = vpack.c.b16 %v1026, %v1025
        %v1037 = vpack.c.b16 %v1028, %v1027
        %v1038 = vpack.c.b16 %v1030, %v1029
        %1047 = vmatprep.subr.bf16.mxu0 0
        %1048 = vmatpush1.bf16.msra.mxu0 %v1038
        %1049 = vmatprep.subr.bf16.mxu0 0
        %1050 = vmatpush1.bf16.msra.mxu0 %v1037
        %1051 = vmatprep.subr.bf16.mxu0 0
        %1052 = vmatpush1.bf16.msra.mxu0 %v1036
        %1053 = vmatprep.subr.bf16.mxu0 0
        %1054 = vmatpush1.bf16.msra.mxu0 %v1035
        %1055 = vmatprep.subr.bf16.mxu0 0
        %1056 = vmatpush1.bf16.msra.mxu0 %v1034
        %1057 = vmatprep.subr.bf16.mxu0 0
        %1058 = vmatpush1.bf16.msra.mxu0 %v1033
        %1059 = vmatprep.subr.bf16.mxu0 0
        %1060 = vmatpush1.bf16.msra.mxu0 %v1032
        %1061 = vmatprep.subr.bf16.mxu0 0
        %1062 = vmatpush1.bf16.msra.mxu0 %v1031
        %1063 = vmatprep.subr.bf16.mxu0 0
        %1064 = vmatpush2.bf16.msra.mxu0 0
        %1065 = vmatprep.subr.bf16.mxu0 0
        %1066 = vmatpush2.bf16.msra.mxu0 0
        %1067 = vmatprep.subr.bf16.mxu0 0
        %1068 = vmatpush2.bf16.msra.mxu0 0
        %1069 = vmatprep.subr.bf16.mxu0 0
        %1070 = vmatpush2.bf16.msra.mxu0 0
        %1071 = vmatprep.subr.bf16.mxu0 0
        %1072 = vmatpush2.bf16.msra.mxu0 0
        %1073 = vmatprep.subr.bf16.mxu0 0
        %1074 = vmatpush2.bf16.msra.mxu0 0
        %1075 = vmatprep.subr.bf16.mxu0 0
        %1076 = vmatpush2.bf16.msra.mxu0 0
        %1077 = vmatprep.subr.bf16.mxu0 0
        %1078 = vmatpush2.bf16.msra.mxu0 0
        %1079 = vmatprep.mubr.bf16.mxu0 0
        %1080 = vmatmul.mubr.bf16.gmra.mxu0 %v983
        %v1081 = vpop.f32.mrf.mxu0
        %v1082 = vadd.f32 0.0, %v1081
        %v1083 = vpop.f32.mrf.mxu0
        %v1084 = vpop.f32.mrf.mxu0
        %v1085 = vadd.f32 0.0, %v1084
        %v1086 = vpop.f32.mrf.mxu0
        %1087 = vmatprep.mubr.bf16.mxu0 0
        %1088 = vmatmul.mubr.bf16.gmra.mxu0 %v984
        %v1089 = vpop.f32.mrf.mxu0
        %v1090 = vadd.f32 0.0, %v1089
        %v1091 = vpop.f32.mrf.mxu0
        %v1092 = vpop.f32.mrf.mxu0
        %v1093 = vadd.f32 0.0, %v1092
        %v1094 = vpop.f32.mrf.mxu0
        %1095 = vmatprep.mubr.bf16.mxu0 0
        %1096 = vmatmul.mubr.bf16.gmra.mxu0 %v985
        %v1097 = vpop.f32.mrf.mxu0
        %v1098 = vadd.f32 0.0, %v1097
        %v1099 = vpop.f32.mrf.mxu0
        %v1100 = vpop.f32.mrf.mxu0
        %v1101 = vadd.f32 0.0, %v1100
        %v1102 = vpop.f32.mrf.mxu0
        %1103 = vmatprep.mubr.bf16.mxu0 0
        %1104 = vmatmul.mubr.bf16.gmra.mxu0 %v986
        %v1105 = vpop.f32.mrf.mxu0
        %v1106 = vadd.f32 0.0, %v1105
        %v1107 = vpop.f32.mrf.mxu0
        %v1108 = vpop.f32.mrf.mxu0
        %v1109 = vadd.f32 0.0, %v1108
        %v1110 = vpop.f32.mrf.mxu0
        %1111 = vmatprep.mubr.bf16.mxu0 0
        %1112 = vmatmul.mubr.bf16.gmra.mxu0 %v987
        %v1113 = vpop.f32.mrf.mxu0
        %v1114 = vadd.f32 0.0, %v1113
        %v1115 = vpop.f32.mrf.mxu0
        %v1116 = vpop.f32.mrf.mxu0
        %v1117 = vadd.f32 0.0, %v1116
        %v1118 = vpop.f32.mrf.mxu0
        %1119 = vmatprep.mubr.bf16.mxu0 0
        %1120 = vmatmul.mubr.bf16.gmra.mxu0 %v988
        %v1121 = vpop.f32.mrf.mxu0
        %v1122 = vadd.f32 0.0, %v1121
        %v1123 = vpop.f32.mrf.mxu0
        %v1124 = vpop.f32.mrf.mxu0
        %v1125 = vadd.f32 0.0, %v1124
        %v1126 = vpop.f32.mrf.mxu0
        %1127 = vmatprep.mubr.bf16.mxu0 0
        %1128 = vmatmul.mubr.bf16.gmra.mxu0 %v989
        %v1129 = vpop.f32.mrf.mxu0
        %v1130 = vadd.f32 0.0, %v1129
        %v1131 = vpop.f32.mrf.mxu0
        %v1132 = vpop.f32.mrf.mxu0
        %v1133 = vadd.f32 0.0, %v1132
        %v1134 = vpop.f32.mrf.mxu0
        %1135 = vmatprep.mubr.bf16.mxu0 0
        %1136 = vmatmul.mubr.bf16.gmra.mxu0 %v990
        %v1137 = vpop.f32.mrf.mxu0
        %v1138 = vadd.f32 0.0, %v1137
        %v1139 = vpop.f32.mrf.mxu0
        %v1140 = vpop.f32.mrf.mxu0
        %v1141 = vadd.f32 0.0, %v1140
        %v1142 = vpop.f32.mrf.mxu0
        %1143 = vdwg.mxu0
        %v1144 = vadd.f32 %v903, %v1082
        %v1145 = vadd.f32 %v904, %v1085
        %v1146 = vadd.f32 %v905, %v1090
        %v1147 = vadd.f32 %v906, %v1093
        %v1148 = vadd.f32 %v907, %v1098
        %v1149 = vadd.f32 %v908, %v1101
        %v1150 = vadd.f32 %v909, %v1106
        %v1151 = vadd.f32 %v910, %v1109
        %v1152 = vadd.f32 %v911, %v1114
        %v1153 = vadd.f32 %v912, %v1117
        %v1154 = vadd.f32 %v913, %v1122
        %v1155 = vadd.f32 %v914, %v1125
        %v1156 = vadd.f32 %v915, %v1130
        %v1157 = vadd.f32 %v916, %v1133
        %v1158 = vadd.f32 %v917, %v1138
        %v1159 = vadd.f32 %v918, %v1141
        %1160 = vst.msk [vmem:[#allocation3] sm:$0xff] %vm886, %v1144
        %1161 = vst.msk [vmem:[#allocation3 + $0x8] sm:$0xff] %vm886, %v1145
        %1162 = vst.msk [vmem:[#allocation3 + $0x10] sm:$0xff] %vm886, %v1146
        %1163 = vst.msk [vmem:[#allocation3 + $0x18] sm:$0xff] %vm886, %v1147
        %1164 = vst.msk [vmem:[#allocation3 + $0x20] sm:$0xff] %vm886, %v1148
        %1165 = vst.msk [vmem:[#allocation3 + $0x28] sm:$0xff] %vm886, %v1149
        %1166 = vst.msk [vmem:[#allocation3 + $0x30] sm:$0xff] %vm886, %v1150
        %1167 = vst.msk [vmem:[#allocation3 + $0x38] sm:$0xff] %vm886, %v1151
        %1168 = vst.msk [vmem:[#allocation3 + $0x40] sm:$0xff] %vm886, %v1152
        %1169 = vst.msk [vmem:[#allocation3 + $0x48] sm:$0xff] %vm886, %v1153
        %1170 = vst.msk [vmem:[#allocation3 + $0x50] sm:$0xff] %vm886, %v1154
        %1171 = vst.msk [vmem:[#allocation3 + $0x58] sm:$0xff] %vm886, %v1155
        %1172 = vst.msk [vmem:[#allocation3 + $0x60] sm:$0xff] %vm886, %v1156
        %1173 = vst.msk [vmem:[#allocation3 + $0x68] sm:$0xff] %vm886, %v1157
        %1174 = vst.msk [vmem:[#allocation3 + $0x70] sm:$0xff] %vm886, %v1158
        %1175 = vst.msk [vmem:[#allocation3 + $0x78] sm:$0xff] %vm886, %v1159
        %p1176 = scmp.eq.s32.totalorder %s22, 1
        // Predicated region
        $region131: #{forward.2} parent=117 // pred_check
          %p1177 = pneg %p1176
        $region132: #{forward.2} parent=117 // pred_check_branch
          %1179 = sbr.rel (%p1177) target = $region134
        $region133: #{forward.2} parent=117 // pred_region
          %v1180 = vld [vmem:[#allocation2] sm:$0xff]
          %v1181 = vld [vmem:[#allocation2 + $0x8] sm:$0xff]
          %v1182 = vld [vmem:[#allocation2 + $0x10] sm:$0xff]
          %v1183 = vld [vmem:[#allocation2 + $0x18] sm:$0xff]
          %v1184 = vld [vmem:[#allocation2 + $0x20] sm:$0xff]
          %v1185 = vld [vmem:[#allocation2 + $0x28] sm:$0xff]
          %v1186 = vld [vmem:[#allocation2 + $0x30] sm:$0xff]
          %v1187 = vld [vmem:[#allocation2 + $0x38] sm:$0xff]
          %v1188 = vld [vmem:[#allocation2 + $0x40] sm:$0xff]
          %v1189 = vld [vmem:[#allocation2 + $0x48] sm:$0xff]
          %v1190 = vld [vmem:[#allocation2 + $0x50] sm:$0xff]
          %v1191 = vld [vmem:[#allocation2 + $0x58] sm:$0xff]
          %v1192 = vld [vmem:[#allocation2 + $0x60] sm:$0xff]
          %v1193 = vld [vmem:[#allocation2 + $0x68] sm:$0xff]
          %v1194 = vld [vmem:[#allocation2 + $0x70] sm:$0xff]
          %v1195 = vld [vmem:[#allocation2 + $0x78] sm:$0xff]
          %v1196 = vld [vmem:[%s565] sm:$0xff]
          %v1197 = vld [vmem:[%s565 + $0x8] sm:$0xff]
          %v1198 = vld [vmem:[%s565 + $0x10] sm:$0xff]
          %v1199 = vld [vmem:[%s565 + $0x18] sm:$0xff]
          %v1200 = vld [vmem:[%s565 + $0x20] sm:$0xff]
          %v1201 = vld [vmem:[%s565 + $0x28] sm:$0xff]
          %v1202 = vld [vmem:[%s565 + $0x30] sm:$0xff]
          %v1203 = vld [vmem:[%s565 + $0x38] sm:$0xff]
          %v1204 = vld [vmem:[%s565 + $0x40] sm:$0xff]
          %v1205 = vld [vmem:[%s565 + $0x48] sm:$0xff]
          %v1206 = vld [vmem:[%s565 + $0x50] sm:$0xff]
          %v1207 = vld [vmem:[%s565 + $0x58] sm:$0xff]
          %v1208 = vld [vmem:[%s565 + $0x60] sm:$0xff]
          %v1209 = vld [vmem:[%s565 + $0x68] sm:$0xff]
          %v1210 = vld [vmem:[%s565 + $0x70] sm:$0xff]
          %v1211 = vld [vmem:[%s565 + $0x78] sm:$0xff]
          %1213 = vset.pattern.permute.xlu0 0
          %1214 = vperm.xlu0 %1213, %v1196
          %v1215 = vpop.permute.xlu0 %1214
          %1218 = vset.pattern.permute.xlu0 0
          %1219 = vperm.xlu0 %1218, %v1197
          %v1220 = vpop.permute.xlu0 %1219
          %1223 = vset.pattern.permute.xlu0 0
          %1224 = vperm.xlu0 %1223, %v1198
          %v1225 = vpop.permute.xlu0 %1224
          %1228 = vset.pattern.permute.xlu0 0
          %1229 = vperm.xlu0 %1228, %v1199
          %v1230 = vpop.permute.xlu0 %1229
          %1233 = vset.pattern.permute.xlu0 0
          %1234 = vperm.xlu0 %1233, %v1200
          %v1235 = vpop.permute.xlu0 %1234
          %1238 = vset.pattern.permute.xlu0 0
          %1239 = vperm.xlu0 %1238, %v1201
          %v1240 = vpop.permute.xlu0 %1239
          %1243 = vset.pattern.permute.xlu0 0
          %1244 = vperm.xlu0 %1243, %v1202
          %v1245 = vpop.permute.xlu0 %1244
          %1248 = vset.pattern.permute.xlu0 0
          %1249 = vperm.xlu0 %1248, %v1203
          %v1250 = vpop.permute.xlu0 %1249
          %1253 = vset.pattern.permute.xlu0 0
          %1254 = vperm.xlu0 %1253, %v1204
          %v1255 = vpop.permute.xlu0 %1254
          %1258 = vset.pattern.permute.xlu0 0
          %1259 = vperm.xlu0 %1258, %v1205
          %v1260 = vpop.permute.xlu0 %1259
          %1263 = vset.pattern.permute.xlu0 0
          %1264 = vperm.xlu0 %1263, %v1206
          %v1265 = vpop.permute.xlu0 %1264
          %1268 = vset.pattern.permute.xlu0 0
          %1269 = vperm.xlu0 %1268, %v1207
          %v1270 = vpop.permute.xlu0 %1269
          %1273 = vset.pattern.permute.xlu0 0
          %1274 = vperm.xlu0 %1273, %v1208
          %v1275 = vpop.permute.xlu0 %1274
          %1278 = vset.pattern.permute.xlu0 0
          %1279 = vperm.xlu0 %1278, %v1209
          %v1280 = vpop.permute.xlu0 %1279
          %1283 = vset.pattern.permute.xlu0 0
          %1284 = vperm.xlu0 %1283, %v1210
          %v1285 = vpop.permute.xlu0 %1284
          %1288 = vset.pattern.permute.xlu0 0
          %1289 = vperm.xlu0 %1288, %v1211
          %v1290 = vpop.permute.xlu0 %1289
          %v1292 = vmul.f32 %v1180, %v1215
          %v1293 = vmul.f32 %v1181, %v1220
          %v1294 = vmul.f32 %v1182, %v1225
          %v1295 = vmul.f32 %v1183, %v1230
          %v1296 = vmul.f32 %v1184, %v1235
          %v1297 = vmul.f32 %v1185, %v1240
          %v1298 = vmul.f32 %v1186, %v1245
          %v1299 = vmul.f32 %v1187, %v1250
          %v1300 = vmul.f32 %v1188, %v1255
          %v1301 = vmul.f32 %v1189, %v1260
          %v1302 = vmul.f32 %v1190, %v1265
          %v1303 = vmul.f32 %v1191, %v1270
          %v1304 = vmul.f32 %v1192, %v1275
          %v1305 = vmul.f32 %v1193, %v1280
          %v1306 = vmul.f32 %v1194, %v1285
          %v1307 = vmul.f32 %v1195, %v1290
          %v1308 = vld [vmem:[#allocation3] sm:$0xff]
          %v1309 = vld [vmem:[#allocation3 + $0x8] sm:$0xff]
          %v1310 = vld [vmem:[#allocation3 + $0x10] sm:$0xff]
          %v1311 = vld [vmem:[#allocation3 + $0x18] sm:$0xff]
          %v1312 = vld [vmem:[#allocation3 + $0x20] sm:$0xff]
          %v1313 = vld [vmem:[#allocation3 + $0x28] sm:$0xff]
          %v1314 = vld [vmem:[#allocation3 + $0x30] sm:$0xff]
          %v1315 = vld [vmem:[#allocation3 + $0x38] sm:$0xff]
          %v1316 = vld [vmem:[#allocation3 + $0x40] sm:$0xff]
          %v1317 = vld [vmem:[#allocation3 + $0x48] sm:$0xff]
          %v1318 = vld [vmem:[#allocation3 + $0x50] sm:$0xff]
          %v1319 = vld [vmem:[#allocation3 + $0x58] sm:$0xff]
          %v1320 = vld [vmem:[#allocation3 + $0x60] sm:$0xff]
          %v1321 = vld [vmem:[#allocation3 + $0x68] sm:$0xff]
          %v1322 = vld [vmem:[#allocation3 + $0x70] sm:$0xff]
          %v1323 = vld [vmem:[#allocation3 + $0x78] sm:$0xff]
          %v1324 = vld [vmem:[%s571] sm:$0xff]
          %v1325 = vld [vmem:[%s571 + $0x8] sm:$0xff]
          %v1326 = vld [vmem:[%s571 + $0x10] sm:$0xff]
          %v1327 = vld [vmem:[%s571 + $0x18] sm:$0xff]
          %v1328 = vld [vmem:[%s571 + $0x20] sm:$0xff]
          %v1329 = vld [vmem:[%s571 + $0x28] sm:$0xff]
          %v1330 = vld [vmem:[%s571 + $0x30] sm:$0xff]
          %v1331 = vld [vmem:[%s571 + $0x38] sm:$0xff]
          %v1332 = vld [vmem:[%s571 + $0x40] sm:$0xff]
          %v1333 = vld [vmem:[%s571 + $0x48] sm:$0xff]
          %v1334 = vld [vmem:[%s571 + $0x50] sm:$0xff]
          %v1335 = vld [vmem:[%s571 + $0x58] sm:$0xff]
          %v1336 = vld [vmem:[%s571 + $0x60] sm:$0xff]
          %v1337 = vld [vmem:[%s571 + $0x68] sm:$0xff]
          %v1338 = vld [vmem:[%s571 + $0x70] sm:$0xff]
          %v1339 = vld [vmem:[%s571 + $0x78] sm:$0xff]
          %1341 = vset.pattern.permute.xlu0 0
          %1342 = vperm.xlu0 %1341, %v1324
          %v1343 = vpop.permute.xlu0 %1342
          %1346 = vset.pattern.permute.xlu0 0
          %1347 = vperm.xlu0 %1346, %v1325
          %v1348 = vpop.permute.xlu0 %1347
          %1351 = vset.pattern.permute.xlu0 0
          %1352 = vperm.xlu0 %1351, %v1326
          %v1353 = vpop.permute.xlu0 %1352
          %1356 = vset.pattern.permute.xlu0 0
          %1357 = vperm.xlu0 %1356, %v1327
          %v1358 = vpop.permute.xlu0 %1357
          %1361 = vset.pattern.permute.xlu0 0
          %1362 = vperm.xlu0 %1361, %v1328
          %v1363 = vpop.permute.xlu0 %1362
          %1366 = vset.pattern.permute.xlu0 0
          %1367 = vperm.xlu0 %1366, %v1329
          %v1368 = vpop.permute.xlu0 %1367
          %1371 = vset.pattern.permute.xlu0 0
          %1372 = vperm.xlu0 %1371, %v1330
          %v1373 = vpop.permute.xlu0 %1372
          %1376 = vset.pattern.permute.xlu0 0
          %1377 = vperm.xlu0 %1376, %v1331
          %v1378 = vpop.permute.xlu0 %1377
          %1381 = vset.pattern.permute.xlu0 0
          %1382 = vperm.xlu0 %1381, %v1332
          %v1383 = vpop.permute.xlu0 %1382
          %1386 = vset.pattern.permute.xlu0 0
          %1387 = vperm.xlu0 %1386, %v1333
          %v1388 = vpop.permute.xlu0 %1387
          %1391 = vset.pattern.permute.xlu0 0
          %1392 = vperm.xlu0 %1391, %v1334
          %v1393 = vpop.permute.xlu0 %1392
          %1396 = vset.pattern.permute.xlu0 0
          %1397 = vperm.xlu0 %1396, %v1335
          %v1398 = vpop.permute.xlu0 %1397
          %1401 = vset.pattern.permute.xlu0 0
          %1402 = vperm.xlu0 %1401, %v1336
          %v1403 = vpop.permute.xlu0 %1402
          %1406 = vset.pattern.permute.xlu0 0
          %1407 = vperm.xlu0 %1406, %v1337
          %v1408 = vpop.permute.xlu0 %1407
          %1411 = vset.pattern.permute.xlu0 0
          %1412 = vperm.xlu0 %1411, %v1338
          %v1413 = vpop.permute.xlu0 %1412
          %1416 = vset.pattern.permute.xlu0 0
          %1417 = vperm.xlu0 %1416, %v1339
          %v1418 = vpop.permute.xlu0 %1417
          %v1420 = vmul.f32 %v1308, %v1343
          %v1421 = vmul.f32 %v1309, %v1348
          %v1422 = vmul.f32 %v1310, %v1353
          %v1423 = vmul.f32 %v1311, %v1358
          %v1424 = vmul.f32 %v1312, %v1363
          %v1425 = vmul.f32 %v1313, %v1368
          %v1426 = vmul.f32 %v1314, %v1373
          %v1427 = vmul.f32 %v1315, %v1378
          %v1428 = vmul.f32 %v1316, %v1383
          %v1429 = vmul.f32 %v1317, %v1388
          %v1430 = vmul.f32 %v1318, %v1393
          %v1431 = vmul.f32 %v1319, %v1398
          %v1432 = vmul.f32 %v1320, %v1403
          %v1433 = vmul.f32 %v1321, %v1408
          %v1434 = vmul.f32 %v1322, %v1413
          %v1435 = vmul.f32 %v1323, %v1418
          %1452 = vrot.lane.b32.xlu0 %v1420, 64
          %v1453 = vpop.permute.xlu0 %1452
          %1454 = vrot.lane.b32.xlu0 %v1421, 64
          %v1455 = vpop.permute.xlu0 %1454
          %1456 = vrot.lane.b32.xlu0 %v1422, 64
          %v1457 = vpop.permute.xlu0 %1456
          %1458 = vrot.lane.b32.xlu0 %v1423, 64
          %v1459 = vpop.permute.xlu0 %1458
          %1460 = vrot.lane.b32.xlu0 %v1424, 64
          %v1461 = vpop.permute.xlu0 %1460
          %1462 = vrot.lane.b32.xlu0 %v1425, 64
          %v1463 = vpop.permute.xlu0 %1462
          %1464 = vrot.lane.b32.xlu0 %v1426, 64
          %v1465 = vpop.permute.xlu0 %1464
          %1466 = vrot.lane.b32.xlu0 %v1427, 64
          %v1467 = vpop.permute.xlu0 %1466
          %1468 = vrot.lane.b32.xlu0 %v1428, 64
          %v1469 = vpop.permute.xlu0 %1468
          %1470 = vrot.lane.b32.xlu0 %v1429, 64
          %v1471 = vpop.permute.xlu0 %1470
          %1472 = vrot.lane.b32.xlu0 %v1430, 64
          %v1473 = vpop.permute.xlu0 %1472
          %1474 = vrot.lane.b32.xlu0 %v1431, 64
          %v1475 = vpop.permute.xlu0 %1474
          %1476 = vrot.lane.b32.xlu0 %v1432, 64
          %v1477 = vpop.permute.xlu0 %1476
          %1478 = vrot.lane.b32.xlu0 %v1433, 64
          %v1479 = vpop.permute.xlu0 %1478
          %1480 = vrot.lane.b32.xlu0 %v1434, 64
          %v1481 = vpop.permute.xlu0 %1480
          %1482 = vrot.lane.b32.xlu0 %v1435, 64
          %v1483 = vpop.permute.xlu0 %1482
          %v1500 = vsel %vm886, %v1292, %v1453
          %v1501 = vsel %vm886, %v1293, %v1455
          %v1502 = vsel %vm886, %v1294, %v1457
          %v1503 = vsel %vm886, %v1295, %v1459
          %v1504 = vsel %vm886, %v1296, %v1461
          %v1505 = vsel %vm886, %v1297, %v1463
          %v1506 = vsel %vm886, %v1298, %v1465
          %v1507 = vsel %vm886, %v1299, %v1467
          %v1508 = vsel %vm886, %v1300, %v1469
          %v1509 = vsel %vm886, %v1301, %v1471
          %v1510 = vsel %vm886, %v1302, %v1473
          %v1511 = vsel %vm886, %v1303, %v1475
          %v1512 = vsel %vm886, %v1304, %v1477
          %v1513 = vsel %vm886, %v1305, %v1479
          %v1514 = vsel %vm886, %v1306, %v1481
          %v1515 = vsel %vm886, %v1307, %v1483
          %1516 = vst [vmem:[%s589] sm:$0xff] %v1500
          %1517 = vst [vmem:[%s589 + $0x8] sm:$0xff] %v1501
          %1518 = vst [vmem:[%s589 + $0x10] sm:$0xff] %v1502
          %1519 = vst [vmem:[%s589 + $0x18] sm:$0xff] %v1503
          %1520 = vst [vmem:[%s589 + $0x20] sm:$0xff] %v1504
          %1521 = vst [vmem:[%s589 + $0x28] sm:$0xff] %v1505
          %1522 = vst [vmem:[%s589 + $0x30] sm:$0xff] %v1506
          %1523 = vst [vmem:[%s589 + $0x38] sm:$0xff] %v1507
          %1524 = vst [vmem:[%s589 + $0x40] sm:$0xff] %v1508
          %1525 = vst [vmem:[%s589 + $0x48] sm:$0xff] %v1509
          %1526 = vst [vmem:[%s589 + $0x50] sm:$0xff] %v1510
          %1527 = vst [vmem:[%s589 + $0x58] sm:$0xff] %v1511
          %1528 = vst [vmem:[%s589 + $0x60] sm:$0xff] %v1512
          %1529 = vst [vmem:[%s589 + $0x68] sm:$0xff] %v1513
          %1530 = vst [vmem:[%s589 + $0x70] sm:$0xff] %v1514
          %1531 = vst [vmem:[%s589 + $0x78] sm:$0xff] %v1515
        $region134: #{forward.2} parent=117 // pred_fallthru
          _
        %s1532 = smul.u32 16, %s21
        %p1533 = scmp.lt.s32.totalorder %s1532, 31
        %s1534 = scalar_select %p1533, %s1532, 31
        %s1535 = smul.addr %s1534, 8
        %s1536 = scalar_lea.vmem %s6, %s1535
        // Predicated region
        $region135: #{forward.2} parent=117 // pred_check
          %p1537 = pneg %p207
        $region136: #{forward.2} parent=117 // pred_check_branch
          %1539 = sbr.rel (%p1537) target = $region138
        $region137: #{forward.2} parent=117 // pred_region
          %s1540 = smul.u32 16, %s21
        $region138: #{forward.2} parent=117 // pred_fallthru
          _
      $region118: #{forward.2} parent=5 // pred_fallthru
        _
      %p1541 = scmp.le.s32.totalorder 2, %s12
      // Predicated region
      $region139: #{forward.2} parent=5 // pred_check
        %p1542 = pneg %p1541
      $region140: #{forward.2} parent=5 // pred_check_branch
        %1544 = sbr.rel (%p1542) target = $region142
      $region141: #{forward.2} parent=5 // pred_region
        %s1545 = ssub.s32 %s12, 2
        // Predicated region
        $region143: #{forward.2} parent=141 // pred_check
          %p1546 = pneg %p213
        $region144: #{forward.2} parent=141 // pred_check_branch
          %1548 = sbr.rel (%p1546) target = $region146
        $region145: #{forward.2} parent=141 // pred_region
          %s1549 = smul.u32 16, %s23
          %p1550 = scmp.lt.s32.totalorder %s1549, 31
          %s1551 = scalar_select %p1550, %s1549, 31
          %s1552 = smul.addr %s1551, 8
          %s1553 = scalar_lea.vmem %s6, %s1552
        $region146: #{forward.2} parent=141 // pred_fallthru
          _
      $region142: #{forward.2} parent=5 // pred_fallthru
        _
    $region6: #{forward.2} parent=1 // loop_footer
      %s16 = sadd.s32 1, %s12
    $region7: #{forward.2} parent=1 // loop_footer_branch
      %11 = sbr.rel target = $region3
    $region8: #{forward.2} parent=1 // loop_exit
      _

</llo_original>
